<compile_context>
chip_gen: v7x
topology: tpu7x:2x2x1
jax: 0.10.0
libtpu: 0.0.40
codegen_flags: <defaults>
</compile_context>

<pallas_src>
import functools
import math
import numpy as np
import jax
import jax.numpy as jnp
from jax import lax
from jax.experimental import pallas as pl
from jax.experimental.pallas import tpu as pltpu

TIME_DIM = 256
TIMESTEPS = 1000
ATOM_EMB_DIM = 32
HIDDEN = 128
D_ATOM = ATOM_EMB_DIM + 6          # 38 true per-atom feature columns
D_ATOM_PAD = 128                   # padded to one lane-width
D_GRAPH = TIME_DIM + 6             # 262 per-graph columns (hoisted to XLA)
D_IN = D_ATOM + D_GRAPH            # 300 (reference first-layer width)
D_OUT_PAD = 128                    # fused coord(3)+lattice(6) head, lane-dense

_VMEM = pl.BlockSpec(memory_space=pltpu.MemorySpace.VMEM)


def _round_up(x, m):
    return ((x + m - 1) // m) * m


def _choose_row_tile(n_atoms):
    # >= 2 grid steps where possible (keeps both v7x TensorCores busy under
    # "parallel" semantics) and tiles up to 1024 rows for large N to amortize
    # the ~0.35 us fixed per-grid-step overhead.  VMEM per step stays < 2 MiB.
    half = _round_up(max(1, (n_atoms + 1) // 2), 128)
    return int(min(max(128, half), 1024))


# --------------------------------------------------------------------------
# Kernel A: decoder MLP trunk + fused heads (stand-in for CSPNet)
# --------------------------------------------------------------------------
def _decoder_kernel(x_ref, g_ref, w1_ref, w2_ref, b2_ref, wh_ref, bh_ref, out_ref):
    # First layer: per-atom columns through the MXU; the per-graph first-layer
    # contribution (time embedding + crystal family, incl. b1) arrives
    # pre-multiplied from XLA as a per-row bias g (bf16, cast up here).
    h = jnp.dot(x_ref[...], w1_ref[...], preferred_element_type=jnp.float32)
    h = h + g_ref[...].astype(jnp.float32)
    h = h / (1.0 + jnp.exp(-h))                      # SiLU (EUP exp, exact div)
    h = jnp.dot(h.astype(jnp.bfloat16), w2_ref[...],
                preferred_element_type=jnp.float32) + b2_ref[...]
    h = h / (1.0 + jnp.exp(-h))
    # fused coord+lattice heads: one (HIDDEN, 128) weight -> one wide store
    out = jnp.dot(h.astype(jnp.bfloat16), wh_ref[...],
                  preferred_element_type=jnp.float32) + bh_ref[...]
    out_ref[...] = out.astype(out_ref.dtype)         # bf16 writeback halves HBM


def decoder_mlp(x_pad_bf16, g_pad_bf16, p, row_tile):
    n_pad = x_pad_bf16.shape[0]

    def full(a):
        return pl.BlockSpec(a.shape, lambda i: (0, 0))

    return pl.pallas_call(
        _decoder_kernel,
        out_shape=jax.ShapeDtypeStruct((n_pad, D_OUT_PAD), jnp.bfloat16),
        grid=(n_pad // row_tile,),
        in_specs=[pl.BlockSpec((row_tile, D_ATOM_PAD), lambda i: (i, 0)),
                  pl.BlockSpec((row_tile, HIDDEN), lambda i: (i, 0)),
                  full(p['w1_atom']),
                  full(p['w2']), full(p['b2']),
                  full(p['wh']), full(p['bh'])],
        out_specs=pl.BlockSpec((row_tile, D_OUT_PAD), lambda i: (i, 0)),
        compiler_params=pltpu.CompilerParams(
            dimension_semantics=("parallel",),
            vmem_limit_bytes=32 * 1024 * 1024),
    )(x_pad_bf16, g_pad_bf16, p['w1_atom'], p['w2'], p['b2'], p['wh'], p['bh'])


# --------------------------------------------------------------------------
# Kernel B: wrapped-normal score target + coord MSE (lane+sublane dense)
# --------------------------------------------------------------------------
def _coord_loss_kernel(x_ref, c_ref, rs_ref, px_ref, out_ref, *, inv_count):
    x = x_ref[...]          # sigma_per_atom * rand_x_anchor, flattened dense
    c = c_ref[...]          # half_inv_sig2 = 1/(2 sigma^2)   (0 on padding)
    rs = rs_ref[...]        # 1/sqrt(sigma_norm)              (0 on padding)
    px = px_ref[...]        # ops_inv @ pred_x                (0 on padding)

    inv_sig2 = 2.0 * c
    # e_i = exp(-(x+i)^2 c).  Geometric recurrence from i=0 in both directions:
    #   e_{i+1}/e_i = exp(-(2x+2i+1)c),  e_{i-1}/e_i = exp((2x+2i-1)c),
    #   successive ratios differ by q = exp(-2c).  4 exps instead of 21.
    e0 = jnp.exp(-(x * x) * c)
    q = jnp.exp(-inv_sig2)
    u = jnp.exp(-(2.0 * x + 1.0) * c)     # e_{+1}/e_0
    d = jnp.exp((2.0 * x - 1.0) * c)      # e_{-1}/e_0
    num = x * e0
    den = e0
    e_up = e0
    e_dn = e0
    for k in range(1, 11):                # i = +-1 .. +-10  (N=10, T=1)
        e_up = e_up * u
        e_dn = e_dn * d
        num = num + (x + float(k)) * e_up + (x - float(k)) * e_dn
        den = den + e_up + e_dn
        u = u * q
        d = d * q
    # d_log_p_wrapped_normal = (sum_i (x+i) e_i) / sigma^2 / sum_i e_i
    score = (num * inv_sig2) / (den + 1e-30)   # exact divide; den >= e0 > 0
    diff = px - score * rs
    out_ref[...] = jnp.sum(diff * diff, keepdims=True) * inv_count


def coord_loss(x_na3, half_inv_sig2_na1, rsqrt_sn_na1, px_na3, n_atoms):
    # Repack lane+sublane dense: broadcast per-atom scalars to (N,3), flatten
    # to 3N, pad to a multiple of 1024 and reshape to (M,128), M % 8 == 0.
    total = 3 * n_atoms
    padded = _round_up(max(total, 1024), 1024)

    def pack(a):
        flat = a.reshape(-1)
        flat = jnp.pad(flat, (0, padded - total))
        return flat.reshape(padded // 128, 128)

    x_t = pack(x_na3)
    c_t = pack(jnp.broadcast_to(half_inv_sig2_na1, (n_atoms, 3)))
    rs_t = pack(jnp.broadcast_to(rsqrt_sn_na1, (n_atoms, 3)))
    px_t = pack(px_na3)

    kern = functools.partial(_coord_loss_kernel, inv_count=1.0 / float(total))
    return pl.pallas_call(
        kern,
        out_shape=jax.ShapeDtypeStruct((1, 1), jnp.float32),
        in_specs=[_VMEM] * 4,
        out_specs=_VMEM,
    )(x_t, c_t, rs_t, px_t)[0, 0]


# --------------------------------------------------------------------------
# Plain-XLA glue: time embedding, schedules, lattice math, crystal family
# --------------------------------------------------------------------------
_HALF = TIME_DIM // 2
_FREQS = jnp.asarray(
    np.exp(-np.arange(_HALF) * (math.log(10000.0) / (_HALF - 1))), jnp.float32)


def time_embedding(times_f32):
    arg = times_f32[:, None] * _FREQS[None, :]
    return jnp.concatenate([jnp.sin(arg), jnp.cos(arg)], axis=-1)


def build_tables():
    T = TIMESTEPS
    s = 0.008
    x = np.linspace(0, T, T + 1)
    ac = np.cos(((x / T) + s) / (1 + s) * np.pi * 0.5) ** 2
    ac = ac / ac[0]
    betas = np.clip(1.0 - ac[1:] / ac[:-1], 1e-4, 0.9999)
    betas = np.concatenate([np.zeros(1), betas])
    alphas = 1.0 - betas
    alphas_cumprod = np.cumprod(alphas)

    sig = np.exp(np.linspace(np.log(0.005), np.log(0.5), T))
    sigmas = np.concatenate([np.zeros(1), sig])

    # deterministic quadrature stand-in for the Monte-Carlo sigma_norm table
    z = np.linspace(-3.0, 3.0, 61)
    w = np.exp(-0.5 * z ** 2)
    w = w / w.sum()
    xg = sig[:, None] * z[None, :]
    sg = sig[:, None]
    num = np.zeros_like(xg)
    den = np.zeros_like(xg)
    for i in range(-10, 11):
        xi = xg + i
        e = np.exp(-xi ** 2 / (2.0 * sg ** 2))
        num += xi / sg ** 2 * e
        den += e
    score = num / den
    snorm = (score ** 2 * sg ** 2 * w[None, :]).sum(-1)
    sigmas_norm = np.concatenate([np.ones(1), snorm])

    return {'betas': jnp.asarray(betas, jnp.float32),
            'alphas_cumprod': jnp.asarray(alphas_cumprod, jnp.float32),
            'sigmas': jnp.asarray(sigmas, jnp.float32),
            'sigmas_norm': jnp.asarray(sigmas_norm, jnp.float32)}


def lattice_params_to_matrix(lengths, angles):
    ar = jnp.deg2rad(angles)
    cos = jnp.cos(ar)
    sin = jnp.sin(ar)
    val = (cos[:, 0] * cos[:, 1] - cos[:, 2]) / (sin[:, 0] * sin[:, 1])
    val = jnp.clip(val, -1.0, 1.0)
    gamma_star = jnp.arccos(val)
    zeros = jnp.zeros_like(lengths[:, 0])
    v_a = jnp.stack([lengths[:, 0] * sin[:, 1], zeros, lengths[:, 0] * cos[:, 1]], -1)
    v_b = jnp.stack([-lengths[:, 1] * sin[:, 0] * jnp.cos(gamma_star),
                     lengths[:, 1] * sin[:, 0] * jnp.sin(gamma_star),
                     lengths[:, 1] * cos[:, 0]], -1)
    v_c = jnp.stack([zeros, zeros, lengths[:, 2]], -1)
    return jnp.stack([v_a, v_b, v_c], axis=1)


def spacegroup_mask(sg):
    # stand-in for CrystalFamily.proj_k_to_spacegroup (per-spacegroup mask)
    sgf = sg.astype(jnp.float32)
    ones = jnp.ones_like(sgf)
    return jnp.stack([ones, ones, ones,
                      (sgf <= 194).astype(jnp.float32),
                      (sgf <= 142).astype(jnp.float32),
                      (sgf <= 74).astype(jnp.float32)], -1)


def init_params(key):
    ks = jax.random.split(key, 5)

    def lin(k, i, o):
        return jax.random.normal(k, (i, o), jnp.float32) / np.sqrt(i)

    w1_full = lin(ks[1], D_IN, HIDDEN)                     # reference (300,128)
    w1_atom = jnp.zeros((D_ATOM_PAD, HIDDEN), jnp.float32).at[:D_ATOM].set(
        w1_full[:D_ATOM])
    w1_graph = w1_full[D_ATOM:]                            # (262,128) stays f32/XLA
    wc = lin(ks[3], HIDDEN, 3)
    wl = lin(ks[4], HIDDEN, 6)
    wh = jnp.zeros((HIDDEN, D_OUT_PAD), jnp.float32).at[:, 0:3].set(wc).at[:, 3:9].set(wl)
    return {
        'atom_emb': 0.1 * jax.random.normal(ks[0], (101, ATOM_EMB_DIM), jnp.float32),
        'w1_atom': w1_atom.astype(jnp.bfloat16),
        'w1_graph': w1_graph,
        'b1': jnp.zeros((1, HIDDEN), jnp.float32),
        'w2': lin(ks[2], HIDDEN, HIDDEN).astype(jnp.bfloat16),
        'b2': jnp.zeros((1, HIDDEN), jnp.float32),
        'wh': wh.astype(jnp.bfloat16),
        'bh': jnp.zeros((1, D_OUT_PAD), jnp.float32),
    }


def cspnet_decoder(params, time_emb, atom_types, frac, crys_fam,
                   batch_idx, num_atoms, batch_size):
    # TODO(synk): real CSPNet does graph message passing; per-node MLP stand-in.
    # Per-graph first-layer contribution computed once per graph in XLA (tiny
    # (B,262)@(262,128) matmul incl. b1), gathered per atom as a bf16 row bias.
    graph_feat = jnp.concatenate([time_emb, crys_fam], axis=-1)       # (B, 262)
    g = graph_feat @ params['w1_graph'] + params['b1']                # (B, 128)
    g_rows = g[batch_idx].astype(jnp.bfloat16)                        # (N, 128)

    atom_feat = params['atom_emb'][atom_types]                        # (N, 32)
    frac_feat = jnp.concatenate([jnp.sin(2.0 * np.pi * frac),
                                 jnp.cos(2.0 * np.pi * frac)], axis=-1)
    x = jnp.concatenate([atom_feat, frac_feat], axis=-1)              # (N, 38)

    N = x.shape[0]
    row_tile = _choose_row_tile(N)
    n_pad = _round_up(N, row_tile)
    x = jnp.pad(x, ((0, n_pad - N), (0, D_ATOM_PAD - D_ATOM))).astype(jnp.bfloat16)
    g_rows = jnp.pad(g_rows, ((0, n_pad - N), (0, 0)))

    out = decoder_mlp(x, g_rows, params, row_tile)                    # (n_pad,128) bf16
    pred_x = out[:N, 0:3].astype(jnp.float32)
    lat_node = out[:N, 3:9].astype(jnp.float32)
    lat_sum = jax.ops.segment_sum(lat_node, batch_idx, num_segments=batch_size)
    pred_crys_fam = lat_sum / num_atoms.astype(jnp.float32)[:, None]
    return pred_crys_fam, pred_x


@functools.partial(jax.jit, static_argnums=(3,))
def csp_diffusion_forward(params, tables, batch, batch_size, key):
    key_t, key_rx, key_rl = jax.random.split(key, 3)
    B = batch_size
    N = batch['frac_coords'].shape[0]

    times = jax.random.randint(key_t, (B,), 1, TIMESTEPS + 1)
    time_emb = time_embedding(times.astype(jnp.float32))

    ac = tables['alphas_cumprod'][times]
    c0 = jnp.sqrt(ac)[:, None]
    c1 = jnp.sqrt(1.0 - ac)[:, None]
    sig_t = tables['sigmas'][times]
    signorm_t = tables['sigmas_norm'][times]

    # lattice -> 6-vector crystal family (SO(3)-invariant Gram-matrix stand-in
    # for CrystalFamily.de_so3 + m2v)
    L = lattice_params_to_matrix(batch['lengths'], batch['angles'])
    G = jnp.einsum('bij,bkj->bik', L, L)
    ori_crys_fam = jnp.stack([G[:, 0, 0], G[:, 1, 1], G[:, 2, 2],
                              G[:, 0, 1], G[:, 0, 2], G[:, 1, 2]], -1)
    mask = spacegroup_mask(batch['spacegroup'])

    rand_x = jax.random.normal(key_rx, (N, 3), jnp.float32)
    rand_crys_fam = jax.random.normal(key_rl, (B, 6), jnp.float32)

    sig_pa = jnp.repeat(sig_t, batch['num_atoms'], total_repeat_length=N)[:, None]
    signorm_pa = jnp.repeat(signorm_t, batch['num_atoms'], total_repeat_length=N)[:, None]

    # symmetry-op noise transform + noised fractional coords (dense VPU work
    # in XLA; a pallas_call here was launch-bound)
    anchor = batch['anchor_index']
    rand_x_anchor = jnp.einsum('nij,nj->ni', batch['ops_inv'][anchor], rand_x[anchor])
    rand_x_sym = jnp.einsum('nij,nj->ni', batch['ops'][:, :3, :3], rand_x_anchor)
    input_frac = jnp.mod(batch['frac_coords'] + sig_pa * rand_x_sym, 1.0)

    # crystal-family noise mixing + spacegroup projection (B x 6 elementwise)
    ori_p = ori_crys_fam * mask
    rand_crys_fam_p = rand_crys_fam * mask
    input_crys_fam = (c0 * ori_p + c1 * rand_crys_fam_p) * mask

    # decoder (Pallas kernel A inside)
    pred_crys_fam, pred_x = cspnet_decoder(
        params, time_emb, batch['atom_types'], input_frac, input_crys_fam,
        batch['batch'], batch['num_atoms'], B)
    pred_crys_fam = pred_crys_fam * mask

    # lattice MSE (matches F.mse_loss(pred_crys_fam, rand_crys_fam_projected))
    loss_lattice = jnp.mean((pred_crys_fam - rand_crys_fam_p) ** 2)

    # coord loss: ops_inv matvec in XLA, wrapped-normal target + MSE in kernel B
    pred_x_proj = jnp.einsum('nij,nj->ni', batch['ops_inv'], pred_x)
    half_inv_sig2 = 0.5 / (sig_pa * sig_pa)
    rsqrt_sn = lax.rsqrt(signorm_pa)
    loss_coord = coord_loss(sig_pa * rand_x_anchor, half_inv_sig2, rsqrt_sn,
                            pred_x_proj, N)

    loss = loss_lattice + loss_coord
    return {'loss': loss, 'loss_lattice': loss_lattice, 'loss_coord': loss_coord}


# --------------------------------------------------------------------------
if __name__ == "__main__":
    key = jax.random.PRNGKey(0)
    kb, kp, kf = jax.random.split(key, 3)
    k1, k2, k3, k4, k5 = jax.random.split(kb, 5)

    B = 2
    num_atoms = jnp.array([5, 3], jnp.int32)
    N = 8

    frac_coords = jax.random.uniform(k1, (N, 3), jnp.float32)
    atom_types = jax.random.randint(k2, (N,), 1, 95)
    lengths = 3.0 + 2.0 * jax.random.uniform(k3, (B, 3), jnp.float32)
    angles = jnp.full((B, 3), 90.0, jnp.float32) + 10.0 * (jax.random.uniform(k4, (B, 3)) - 0.5)

    M = jax.random.normal(k5, (N, 3, 3), jnp.float32)
    Q, _ = jnp.linalg.qr(M)                       # random rotation-like ops
    ops = jnp.zeros((N, 4, 4), jnp.float32).at[:, :3, :3].set(Q).at[:, 3, 3].set(1.0)
    ops_inv = jnp.transpose(Q, (0, 2, 1))         # exact inverse of the 3x3 block

    batch = {
        'num_atoms': num_atoms,
        'frac_coords': frac_coords,
        'atom_types': atom_types,
        'lengths': lengths,
        'angles': angles,
        'ops': ops,
        'ops_inv': ops_inv,
        'anchor_index': jnp.array([0, 0, 2, 2, 4, 5, 5, 7], jnp.int32),
        'batch': jnp.array([0, 0, 0, 0, 0, 1, 1, 1], jnp.int32),
        'spacegroup': jnp.array([12, 166], jnp.int32),
    }

    params = init_params(kp)
    tables = build_tables()

    out = csp_diffusion_forward(params, tables, batch, B, kf)
    out = jax.tree_util.tree_map(jax.block_until_ready, out)

    assert np.isfinite(float(out['loss']))
    assert np.isfinite(float(out['loss_lattice']))
    assert np.isfinite(float(out['loss_coord']))
    print("KERNEL_OK")
</pallas_src>

<mosaic_0001>
module attributes {stable_mosaic.version = 11 : i64} {
  func.func @_decoder_kernel(%arg0: i32, %arg1: memref<128x128xbf16, #tpu.memory_space<vmem>>, %arg2: memref<128x128xbf16, #tpu.memory_space<vmem>>, %arg3: memref<128x128xbf16, #tpu.memory_space<vmem>>, %arg4: memref<128x128xbf16, #tpu.memory_space<vmem>>, %arg5: memref<1x128xf32, #tpu.memory_space<vmem>>, %arg6: memref<128x128xbf16, #tpu.memory_space<vmem>>, %arg7: memref<1x128xf32, #tpu.memory_space<vmem>>, %arg8: memref<128x128xbf16, #tpu.memory_space<vmem>>) attributes {dimension_semantics = [#tpu.dimension_semantics<parallel>], iteration_bounds = array<i64: 1>, scalar_prefetch = 0 : i64, scratch_operands = 0 : i64, tpu.core_type = #tpu.core_type<tc>, window_params = [{transform_indices = @transform_0, window_bounds = array<i64: 128, 128>}, {transform_indices = @transform_1, window_bounds = array<i64: 128, 128>}, {pipeline_mode = #tpu.pipeline_mode<synchronous>, transform_indices = @transform_2, window_bounds = array<i64: 128, 128>}, {pipeline_mode = #tpu.pipeline_mode<synchronous>, transform_indices = @transform_3, window_bounds = array<i64: 128, 128>}, {pipeline_mode = #tpu.pipeline_mode<synchronous>, transform_indices = @transform_4, window_bounds = array<i64: 1, 128>}, {pipeline_mode = #tpu.pipeline_mode<synchronous>, transform_indices = @transform_5, window_bounds = array<i64: 128, 128>}, {pipeline_mode = #tpu.pipeline_mode<synchronous>, transform_indices = @transform_6, window_bounds = array<i64: 1, 128>}, {transform_indices = @transform_7, window_bounds = array<i64: 128, 128>}]} {
    %c0 = arith.constant 0 : index
    %c0_0 = arith.constant 0 : index
    %0 = vector.load %arg1[%c0, %c0_0] : memref<128x128xbf16, #tpu.memory_space<vmem>>, vector<128x128xbf16>
    %c0_1 = arith.constant 0 : index
    %c0_2 = arith.constant 0 : index
    %1 = vector.load %arg3[%c0_1, %c0_2] : memref<128x128xbf16, #tpu.memory_space<vmem>>, vector<128x128xbf16>
    %cst = arith.constant dense<0.000000e+00> : vector<128x128xf32>
    %2 = tpu.matmul %0, %1, %cst {dimension_numbers = #tpu.dot_dimension_numbers<[1], [0], [0], [1], [0, 0, 1, 1], [], []>} : vector<128x128xbf16>, vector<128x128xbf16>, vector<128x128xf32> -> vector<128x128xf32>
    %c0_3 = arith.constant 0 : index
    %c0_4 = arith.constant 0 : index
    %3 = vector.load %arg2[%c0_3, %c0_4] : memref<128x128xbf16, #tpu.memory_space<vmem>>, vector<128x128xbf16>
    %4 = arith.extf %3 : vector<128x128xbf16> to vector<128x128xf32>
    %5 = arith.addf %2, %4 : vector<128x128xf32>
    %cst_5 = arith.constant 0.000000e+00 : f32
    %6 = vector.broadcast %cst_5 : f32 to vector<128x128xf32>
    %7 = arith.subf %6, %5 : vector<128x128xf32>
    %8 = math.exp %7 : vector<128x128xf32>
    %cst_6 = arith.constant 1.000000e+00 : f32
    %9 = vector.broadcast %cst_6 : f32 to vector<128x128xf32>
    %10 = arith.addf %9, %8 : vector<128x128xf32>
    %11 = arith.divf %5, %10 : vector<128x128xf32>
    %12 = arith.truncf %11 : vector<128x128xf32> to vector<128x128xbf16>
    %c0_7 = arith.constant 0 : index
    %c0_8 = arith.constant 0 : index
    %13 = vector.load %arg4[%c0_7, %c0_8] : memref<128x128xbf16, #tpu.memory_space<vmem>>, vector<128x128xbf16>
    %cst_9 = arith.constant dense<0.000000e+00> : vector<128x128xf32>
    %14 = tpu.matmul %12, %13, %cst_9 {dimension_numbers = #tpu.dot_dimension_numbers<[1], [0], [0], [1], [0, 0, 1, 1], [], []>} : vector<128x128xbf16>, vector<128x128xbf16>, vector<128x128xf32> -> vector<128x128xf32>
    %c0_10 = arith.constant 0 : index
    %c0_11 = arith.constant 0 : index
    %15 = vector.load %arg5[%c0_10, %c0_11] : memref<1x128xf32, #tpu.memory_space<vmem>>, vector<1x128xf32>
    %16 = vector.broadcast %15 : vector<1x128xf32> to vector<128x128xf32>
    %17 = arith.addf %14, %16 : vector<128x128xf32>
    %cst_12 = arith.constant 0.000000e+00 : f32
    %18 = vector.broadcast %cst_12 : f32 to vector<128x128xf32>
    %19 = arith.subf %18, %17 : vector<128x128xf32>
    %20 = math.exp %19 : vector<128x128xf32>
    %cst_13 = arith.constant 1.000000e+00 : f32
    %21 = vector.broadcast %cst_13 : f32 to vector<128x128xf32>
    %22 = arith.addf %21, %20 : vector<128x128xf32>
    %23 = arith.divf %17, %22 : vector<128x128xf32>
    %24 = arith.truncf %23 : vector<128x128xf32> to vector<128x128xbf16>
    %c0_14 = arith.constant 0 : index
    %c0_15 = arith.constant 0 : index
    %25 = vector.load %arg6[%c0_14, %c0_15] : memref<128x128xbf16, #tpu.memory_space<vmem>>, vector<128x128xbf16>
    %cst_16 = arith.constant dense<0.000000e+00> : vector<128x128xf32>
    %26 = tpu.matmul %24, %25, %cst_16 {dimension_numbers = #tpu.dot_dimension_numbers<[1], [0], [0], [1], [0, 0, 1, 1], [], []>} : vector<128x128xbf16>, vector<128x128xbf16>, vector<128x128xf32> -> vector<128x128xf32>
    %c0_17 = arith.constant 0 : index
    %c0_18 = arith.constant 0 : index
    %27 = vector.load %arg7[%c0_17, %c0_18] : memref<1x128xf32, #tpu.memory_space<vmem>>, vector<1x128xf32>
    %28 = vector.broadcast %27 : vector<1x128xf32> to vector<128x128xf32>
    %29 = arith.addf %26, %28 : vector<128x128xf32>
    %30 = arith.truncf %29 : vector<128x128xf32> to vector<128x128xbf16>
    %c0_19 = arith.constant 0 : index
    %c0_20 = arith.constant 0 : index
    %31 = vector.load %arg8[%c0_19, %c0_20] : memref<128x128xbf16, #tpu.memory_space<vmem>>, vector<128x128xbf16>
    tpu.vector_store %arg8[%c0_19, %c0_20], %30 {strides = array<i32>} : memref<128x128xbf16, #tpu.memory_space<vmem>>, vector<128x128xbf16>,
    return
  }
  func.func @transform_0(%arg0: i32) -> (i32, i32) {
    %c0_i32 = arith.constant 0 : i32
    %c0_i32_0 = arith.constant 0 : i32
    return %arg0, %c0_i32 : i32, i32
  }
  func.func @transform_1(%arg0: i32) -> (i32, i32) {
    %c0_i32 = arith.constant 0 : i32
    %c0_i32_0 = arith.constant 0 : i32
    return %arg0, %c0_i32 : i32, i32
  }
  func.func @transform_2(%arg0: i32) -> (i32, i32) {
    %c0_i32 = arith.constant 0 : i32
    %c0_i32_0 = arith.constant 0 : i32
    %c0_i32_1 = arith.constant 0 : i32
    return %c0_i32, %c0_i32_0 : i32, i32
  }
  func.func @transform_3(%arg0: i32) -> (i32, i32) {
    %c0_i32 = arith.constant 0 : i32
    %c0_i32_0 = arith.constant 0 : i32
    %c0_i32_1 = arith.constant 0 : i32
    return %c0_i32, %c0_i32_0 : i32, i32
  }
  func.func @transform_4(%arg0: i32) -> (i32, i32) {
    %c0_i32 = arith.constant 0 : i32
    %c0_i32_0 = arith.constant 0 : i32
    %c0_i32_1 = arith.constant 0 : i32
    return %c0_i32, %c0_i32_0 : i32, i32
  }
  func.func @transform_5(%arg0: i32) -> (i32, i32) {
    %c0_i32 = arith.constant 0 : i32
    %c0_i32_0 = arith.constant 0 : i32
    %c0_i32_1 = arith.constant 0 : i32
    return %c0_i32, %c0_i32_0 : i32, i32
  }
  func.func @transform_6(%arg0: i32) -> (i32, i32) {
    %c0_i32 = arith.constant 0 : i32
    %c0_i32_0 = arith.constant 0 : i32
    %c0_i32_1 = arith.constant 0 : i32
    return %c0_i32, %c0_i32_0 : i32, i32
  }
  func.func @transform_7(%arg0: i32) -> (i32, i32) {
    %c0_i32 = arith.constant 0 : i32
    %c0_i32_0 = arith.constant 0 : i32
    return %arg0, %c0_i32 : i32, i32
  }
}

module attributes {stable_mosaic.version = 11 : i64} {
  func.func @_coord_loss_kernel(%arg0: memref<8x128xf32, #tpu.memory_space<vmem>>, %arg1: memref<8x128xf32, #tpu.memory_space<vmem>>, %arg2: memref<8x128xf32, #tpu.memory_space<vmem>>, %arg3: memref<8x128xf32, #tpu.memory_space<vmem>>, %arg4: memref<1x1xf32, #tpu.memory_space<vmem>>) attributes {dimension_semantics = [], scalar_prefetch = 0 : i64, scratch_operands = 0 : i64, tpu.core_type = #tpu.core_type<tc>} {
    %c0 = arith.constant 0 : index
    %c0_0 = arith.constant 0 : index
    %0 = vector.load %arg0[%c0, %c0_0] : memref<8x128xf32, #tpu.memory_space<vmem>>, vector<8x128xf32>
    %c0_1 = arith.constant 0 : index
    %c0_2 = arith.constant 0 : index
    %1 = vector.load %arg1[%c0_1, %c0_2] : memref<8x128xf32, #tpu.memory_space<vmem>>, vector<8x128xf32>
    %c0_3 = arith.constant 0 : index
    %c0_4 = arith.constant 0 : index
    %2 = vector.load %arg2[%c0_3, %c0_4] : memref<8x128xf32, #tpu.memory_space<vmem>>, vector<8x128xf32>
    %c0_5 = arith.constant 0 : index
    %c0_6 = arith.constant 0 : index
    %3 = vector.load %arg3[%c0_5, %c0_6] : memref<8x128xf32, #tpu.memory_space<vmem>>, vector<8x128xf32>
    %cst = arith.constant 2.000000e+00 : f32
    %4 = vector.broadcast %cst : f32 to vector<8x128xf32>
    %5 = arith.mulf %4, %1 : vector<8x128xf32>
    %6 = arith.mulf %0, %0 : vector<8x128xf32>
    %cst_7 = arith.constant 0.000000e+00 : f32
    %7 = vector.broadcast %cst_7 : f32 to vector<8x128xf32>
    %8 = arith.subf %7, %6 : vector<8x128xf32>
    %9 = arith.mulf %8, %1 : vector<8x128xf32>
    %10 = math.exp %9 : vector<8x128xf32>
    %cst_8 = arith.constant 0.000000e+00 : f32
    %11 = vector.broadcast %cst_8 : f32 to vector<8x128xf32>
    %12 = arith.subf %11, %5 : vector<8x128xf32>
    %13 = math.exp %12 : vector<8x128xf32>
    %cst_9 = arith.constant 2.000000e+00 : f32
    %14 = vector.broadcast %cst_9 : f32 to vector<8x128xf32>
    %15 = arith.mulf %14, %0 : vector<8x128xf32>
    %cst_10 = arith.constant 1.000000e+00 : f32
    %16 = vector.broadcast %cst_10 : f32 to vector<8x128xf32>
    %17 = arith.addf %15, %16 : vector<8x128xf32>
    %cst_11 = arith.constant 0.000000e+00 : f32
    %18 = vector.broadcast %cst_11 : f32 to vector<8x128xf32>
    %19 = arith.subf %18, %17 : vector<8x128xf32>
    %20 = arith.mulf %19, %1 : vector<8x128xf32>
    %21 = math.exp %20 : vector<8x128xf32>
    %cst_12 = arith.constant 2.000000e+00 : f32
    %22 = vector.broadcast %cst_12 : f32 to vector<8x128xf32>
    %23 = arith.mulf %22, %0 : vector<8x128xf32>
    %cst_13 = arith.constant 1.000000e+00 : f32
    %24 = vector.broadcast %cst_13 : f32 to vector<8x128xf32>
    %25 = arith.subf %23, %24 : vector<8x128xf32>
    %26 = arith.mulf %25, %1 : vector<8x128xf32>
    %27 = math.exp %26 : vector<8x128xf32>
    %28 = arith.mulf %0, %10 : vector<8x128xf32>
    %29 = arith.mulf %10, %21 : vector<8x128xf32>
    %30 = arith.mulf %10, %27 : vector<8x128xf32>
    %cst_14 = arith.constant 1.000000e+00 : f32
    %31 = vector.broadcast %cst_14 : f32 to vector<8x128xf32>
    %32 = arith.addf %0, %31 : vector<8x128xf32>
    %33 = arith.mulf %32, %29 : vector<8x128xf32>
    %34 = arith.addf %28, %33 : vector<8x128xf32>
    %cst_15 = arith.constant 1.000000e+00 : f32
    %35 = vector.broadcast %cst_15 : f32 to vector<8x128xf32>
    %36 = arith.subf %0, %35 : vector<8x128xf32>
    %37 = arith.mulf %36, %30 : vector<8x128xf32>
    %38 = arith.addf %34, %37 : vector<8x128xf32>
    %39 = arith.addf %10, %29 : vector<8x128xf32>
    %40 = arith.addf %39, %30 : vector<8x128xf32>
    %41 = arith.mulf %21, %13 : vector<8x128xf32>
    %42 = arith.mulf %27, %13 : vector<8x128xf32>
    %43 = arith.mulf %29, %41 : vector<8x128xf32>
    %44 = arith.mulf %30, %42 : vector<8x128xf32>
    %cst_16 = arith.constant 2.000000e+00 : f32
    %45 = vector.broadcast %cst_16 : f32 to vector<8x128xf32>
    %46 = arith.addf %0, %45 : vector<8x128xf32>
    %47 = arith.mulf %46, %43 : vector<8x128xf32>
    %48 = arith.addf %38, %47 : vector<8x128xf32>
    %cst_17 = arith.constant 2.000000e+00 : f32
    %49 = vector.broadcast %cst_17 : f32 to vector<8x128xf32>
    %50 = arith.subf %0, %49 : vector<8x128xf32>
    %51 = arith.mulf %50, %44 : vector<8x128xf32>
    %52 = arith.addf %48, %51 : vector<8x128xf32>
    %53 = arith.addf %40, %43 : vector<8x128xf32>
    %54 = arith.addf %53, %44 : vector<8x128xf32>
    %55 = arith.mulf %41, %13 : vector<8x128xf32>
    %56 = arith.mulf %42, %13 : vector<8x128xf32>
    %57 = arith.mulf %43, %55 : vector<8x128xf32>
    %58 = arith.mulf %44, %56 : vector<8x128xf32>
    %cst_18 = arith.constant 3.000000e+00 : f32
    %59 = vector.broadcast %cst_18 : f32 to vector<8x128xf32>
    %60 = arith.addf %0, %59 : vector<8x128xf32>
    %61 = arith.mulf %60, %57 : vector<8x128xf32>
    %62 = arith.addf %52, %61 : vector<8x128xf32>
    %cst_19 = arith.constant 3.000000e+00 : f32
    %63 = vector.broadcast %cst_19 : f32 to vector<8x128xf32>
    %64 = arith.subf %0, %63 : vector<8x128xf32>
    %65 = arith.mulf %64, %58 : vector<8x128xf32>
    %66 = arith.addf %62, %65 : vector<8x128xf32>
    %67 = arith.addf %54, %57 : vector<8x128xf32>
    %68 = arith.addf %67, %58 : vector<8x128xf32>
    %69 = arith.mulf %55, %13 : vector<8x128xf32>
    %70 = arith.mulf %56, %13 : vector<8x128xf32>
    %71 = arith.mulf %57, %69 : vector<8x128xf32>
    %72 = arith.mulf %58, %70 : vector<8x128xf32>
    %cst_20 = arith.constant 4.000000e+00 : f32
    %73 = vector.broadcast %cst_20 : f32 to vector<8x128xf32>
    %74 = arith.addf %0, %73 : vector<8x128xf32>
    %75 = arith.mulf %74, %71 : vector<8x128xf32>
    %76 = arith.addf %66, %75 : vector<8x128xf32>
    %cst_21 = arith.constant 4.000000e+00 : f32
    %77 = vector.broadcast %cst_21 : f32 to vector<8x128xf32>
    %78 = arith.subf %0, %77 : vector<8x128xf32>
    %79 = arith.mulf %78, %72 : vector<8x128xf32>
    %80 = arith.addf %76, %79 : vector<8x128xf32>
    %81 = arith.addf %68, %71 : vector<8x128xf32>
    %82 = arith.addf %81, %72 : vector<8x128xf32>
    %83 = arith.mulf %69, %13 : vector<8x128xf32>
    %84 = arith.mulf %70, %13 : vector<8x128xf32>
    %85 = arith.mulf %71, %83 : vector<8x128xf32>
    %86 = arith.mulf %72, %84 : vector<8x128xf32>
    %cst_22 = arith.constant 5.000000e+00 : f32
    %87 = vector.broadcast %cst_22 : f32 to vector<8x128xf32>
    %88 = arith.addf %0, %87 : vector<8x128xf32>
    %89 = arith.mulf %88, %85 : vector<8x128xf32>
    %90 = arith.addf %80, %89 : vector<8x128xf32>
    %cst_23 = arith.constant 5.000000e+00 : f32
    %91 = vector.broadcast %cst_23 : f32 to vector<8x128xf32>
    %92 = arith.subf %0, %91 : vector<8x128xf32>
    %93 = arith.mulf %92, %86 : vector<8x128xf32>
    %94 = arith.addf %90, %93 : vector<8x128xf32>
    %95 = arith.addf %82, %85 : vector<8x128xf32>
    %96 = arith.addf %95, %86 : vector<8x128xf32>
    %97 = arith.mulf %83, %13 : vector<8x128xf32>
    %98 = arith.mulf %84, %13 : vector<8x128xf32>
    %99 = arith.mulf %85, %97 : vector<8x128xf32>
    %100 = arith.mulf %86, %98 : vector<8x128xf32>
    %cst_24 = arith.constant 6.000000e+00 : f32
    %101 = vector.broadcast %cst_24 : f32 to vector<8x128xf32>
    %102 = arith.addf %0, %101 : vector<8x128xf32>
    %103 = arith.mulf %102, %99 : vector<8x128xf32>
    %104 = arith.addf %94, %103 : vector<8x128xf32>
    %cst_25 = arith.constant 6.000000e+00 : f32
    %105 = vector.broadcast %cst_25 : f32 to vector<8x128xf32>
    %106 = arith.subf %0, %105 : vector<8x128xf32>
    %107 = arith.mulf %106, %100 : vector<8x128xf32>
    %108 = arith.addf %104, %107 : vector<8x128xf32>
    %109 = arith.addf %96, %99 : vector<8x128xf32>
    %110 = arith.addf %109, %100 : vector<8x128xf32>
    %111 = arith.mulf %97, %13 : vector<8x128xf32>
    %112 = arith.mulf %98, %13 : vector<8x128xf32>
    %113 = arith.mulf %99, %111 : vector<8x128xf32>
    %114 = arith.mulf %100, %112 : vector<8x128xf32>
    %cst_26 = arith.constant 7.000000e+00 : f32
    %115 = vector.broadcast %cst_26 : f32 to vector<8x128xf32>
    %116 = arith.addf %0, %115 : vector<8x128xf32>
    %117 = arith.mulf %116, %113 : vector<8x128xf32>
    %118 = arith.addf %108, %117 : vector<8x128xf32>
    %cst_27 = arith.constant 7.000000e+00 : f32
    %119 = vector.broadcast %cst_27 : f32 to vector<8x128xf32>
    %120 = arith.subf %0, %119 : vector<8x128xf32>
    %121 = arith.mulf %120, %114 : vector<8x128xf32>
    %122 = arith.addf %118, %121 : vector<8x128xf32>
    %123 = arith.addf %110, %113 : vector<8x128xf32>
    %124 = arith.addf %123, %114 : vector<8x128xf32>
    %125 = arith.mulf %111, %13 : vector<8x128xf32>
    %126 = arith.mulf %112, %13 : vector<8x128xf32>
    %127 = arith.mulf %113, %125 : vector<8x128xf32>
    %128 = arith.mulf %114, %126 : vector<8x128xf32>
    %cst_28 = arith.constant 8.000000e+00 : f32
    %129 = vector.broadcast %cst_28 : f32 to vector<8x128xf32>
    %130 = arith.addf %0, %129 : vector<8x128xf32>
    %131 = arith.mulf %130, %127 : vector<8x128xf32>
    %132 = arith.addf %122, %131 : vector<8x128xf32>
    %cst_29 = arith.constant 8.000000e+00 : f32
    %133 = vector.broadcast %cst_29 : f32 to vector<8x128xf32>
    %134 = arith.subf %0, %133 : vector<8x128xf32>
    %135 = arith.mulf %134, %128 : vector<8x128xf32>
    %136 = arith.addf %132, %135 : vector<8x128xf32>
    %137 = arith.addf %124, %127 : vector<8x128xf32>
    %138 = arith.addf %137, %128 : vector<8x128xf32>
    %139 = arith.mulf %125, %13 : vector<8x128xf32>
    %140 = arith.mulf %126, %13 : vector<8x128xf32>
    %141 = arith.mulf %127, %139 : vector<8x128xf32>
    %142 = arith.mulf %128, %140 : vector<8x128xf32>
    %cst_30 = arith.constant 9.000000e+00 : f32
    %143 = vector.broadcast %cst_30 : f32 to vector<8x128xf32>
    %144 = arith.addf %0, %143 : vector<8x128xf32>
    %145 = arith.mulf %144, %141 : vector<8x128xf32>
    %146 = arith.addf %136, %145 : vector<8x128xf32>
    %cst_31 = arith.constant 9.000000e+00 : f32
    %147 = vector.broadcast %cst_31 : f32 to vector<8x128xf32>
    %148 = arith.subf %0, %147 : vector<8x128xf32>
    %149 = arith.mulf %148, %142 : vector<8x128xf32>
    %150 = arith.addf %146, %149 : vector<8x128xf32>
    %151 = arith.addf %138, %141 : vector<8x128xf32>
    %152 = arith.addf %151, %142 : vector<8x128xf32>
    %153 = arith.mulf %139, %13 : vector<8x128xf32>
    %154 = arith.mulf %140, %13 : vector<8x128xf32>
    %155 = arith.mulf %141, %153 : vector<8x128xf32>
    %156 = arith.mulf %142, %154 : vector<8x128xf32>
    %cst_32 = arith.constant 1.000000e+01 : f32
    %157 = vector.broadcast %cst_32 : f32 to vector<8x128xf32>
    %158 = arith.addf %0, %157 : vector<8x128xf32>
    %159 = arith.mulf %158, %155 : vector<8x128xf32>
    %160 = arith.addf %150, %159 : vector<8x128xf32>
    %cst_33 = arith.constant 1.000000e+01 : f32
    %161 = vector.broadcast %cst_33 : f32 to vector<8x128xf32>
    %162 = arith.subf %0, %161 : vector<8x128xf32>
    %163 = arith.mulf %162, %156 : vector<8x128xf32>
    %164 = arith.addf %160, %163 : vector<8x128xf32>
    %165 = arith.addf %152, %155 : vector<8x128xf32>
    %166 = arith.addf %165, %156 : vector<8x128xf32>
    %167 = arith.mulf %164, %5 : vector<8x128xf32>
    %cst_34 = arith.constant 1.000000e-30 : f32
    %168 = vector.broadcast %cst_34 : f32 to vector<8x128xf32>
    %169 = arith.addf %166, %168 : vector<8x128xf32>
    %170 = arith.divf %167, %169 : vector<8x128xf32>
    %171 = arith.mulf %170, %2 : vector<8x128xf32>
    %172 = arith.subf %3, %171 : vector<8x128xf32>
    %173 = arith.mulf %172, %172 : vector<8x128xf32>
    %174 = vector.shape_cast %173 : vector<8x128xf32> to vector<1x8x128xf32>
    %cst_35 = arith.constant dense<0.000000e+00> : vector<1xf32>
    %175 = vector.multi_reduction <add>, %174, %cst_35 [1, 2] : vector<1x8x128xf32> to vector<1xf32>
    %176 = vector.shape_cast %175 : vector<1xf32> to vector<1x1x1xf32>
    %177 = vector.extract %176[0, 0, 0] : f32 from vector<1x1x1xf32>
    %178 = vector.broadcast %177 : f32 to vector<1x1xf32>
    %cst_36 = arith.constant 0.0416666679 : f32
    %179 = vector.broadcast %cst_36 : f32 to vector<1x1xf32>
    %180 = arith.mulf %178, %179 : vector<1x1xf32>
    %c0_37 = arith.constant 0 : index
    %c0_38 = arith.constant 0 : index
    %181 = vector.load %arg4[%c0_37, %c0_38] : memref<1x1xf32, #tpu.memory_space<vmem>>, vector<1x1xf32>
    tpu.vector_store %arg4[%c0_37, %c0_38], %180 {strides = array<i32>} : memref<1x1xf32, #tpu.memory_space<vmem>>, vector<1x1xf32>,
    return
  }
}

</mosaic_0001>

<llo_original>
// kernel: csp_diffusion_forward.4
$region0: #{csp_diffusion_forward.4}
  #allocation0 [shape = 'u32[]', space=smem, size = 0x4, offset = 0x4, fixed_abs, tag = 'smem constant byte address 0x4 - core index']
  #allocation1 [shape = 'u32[144,128]{1,0:T(1,128)}', space=vmem, size = 0x12000, scoped, tag = 'internal scratch']
  %s0 = inlined_call_operand.vmem [shape: bf16[128,128], index: 0, kind: input, shape index: {}]
  %s1 = inlined_call_operand.vmem [shape: bf16[128,128], index: 1, kind: input, shape index: {}]
  %s2 = inlined_call_operand.vmem [shape: bf16[128,128], index: 2, kind: input, shape index: {}]
  %s3 = inlined_call_operand.vmem [shape: bf16[128,128], index: 3, kind: input, shape index: {}]
  %s4 = inlined_call_operand.vmem [shape: f32[1,128], index: 4, kind: input, shape index: {}]
  %s5 = inlined_call_operand.vmem [shape: bf16[128,128], index: 5, kind: input, shape index: {}]
  %s6 = inlined_call_operand.vmem [shape: f32[1,128], index: 6, kind: input, shape index: {}]
  %s7 = inlined_call_operand.vmem [shape: bf16[128,128], index: 7, kind: output, shape index: {}]
  %s8 = sld [smem:[#allocation0]]
  $region38: #{csp_diffusion_forward.4} parent=0
    _
  %s10 = ssub.s32 1, %s8
  %s11 = scalar_select 0, %s10, %s8
  // Predicated region
  $region2: #{csp_diffusion_forward.4} parent=0 // pred_check
    _
  $region3: #{csp_diffusion_forward.4} parent=0 // pred_check_branch
    %13 = sbr.rel (0) target = $region5
  $region4: #{csp_diffusion_forward.4} parent=0 // pred_region
    _
  $region5: #{csp_diffusion_forward.4} parent=0 // pred_fallthru
    _
  // Predicated region
  $region6: #{csp_diffusion_forward.4} parent=0 // pred_check
    _
  $region7: #{csp_diffusion_forward.4} parent=0 // pred_check_branch
    %15 = sbr.rel (0) target = $region9
  $region8: #{csp_diffusion_forward.4} parent=0 // pred_region
    _
  $region9: #{csp_diffusion_forward.4} parent=0 // pred_fallthru
    _
  // Predicated region
  $region10: #{csp_diffusion_forward.4} parent=0 // pred_check
    _
  $region11: #{csp_diffusion_forward.4} parent=0 // pred_check_branch
    %17 = sbr.rel (0) target = $region13
  $region12: #{csp_diffusion_forward.4} parent=0 // pred_region
    _
  $region13: #{csp_diffusion_forward.4} parent=0 // pred_fallthru
    _
  // Predicated region
  $region14: #{csp_diffusion_forward.4} parent=0 // pred_check
    _
  $region15: #{csp_diffusion_forward.4} parent=0 // pred_check_branch
    %19 = sbr.rel (0) target = $region17
  $region16: #{csp_diffusion_forward.4} parent=0 // pred_region
    _
  $region17: #{csp_diffusion_forward.4} parent=0 // pred_fallthru
    _
  // Predicated region
  $region18: #{csp_diffusion_forward.4} parent=0 // pred_check
    _
  $region19: #{csp_diffusion_forward.4} parent=0 // pred_check_branch
    %21 = sbr.rel (0) target = $region21
  $region20: #{csp_diffusion_forward.4} parent=0 // pred_region
    _
  $region21: #{csp_diffusion_forward.4} parent=0 // pred_fallthru
    _
  // Predicated region
  $region22: #{csp_diffusion_forward.4} parent=0 // pred_check
    _
  $region23: #{csp_diffusion_forward.4} parent=0 // pred_check_branch
    %23 = sbr.rel (0) target = $region25
  $region24: #{csp_diffusion_forward.4} parent=0 // pred_region
    _
  $region25: #{csp_diffusion_forward.4} parent=0 // pred_fallthru
    _
  // Predicated region
  $region26: #{csp_diffusion_forward.4} parent=0 // pred_check
    _
  $region27: #{csp_diffusion_forward.4} parent=0 // pred_check_branch
    %25 = sbr.rel (0) target = $region29
  $region28: #{csp_diffusion_forward.4} parent=0 // pred_region
    _
  $region29: #{csp_diffusion_forward.4} parent=0 // pred_fallthru
    _
  %v27 = vld [vmem:[%s0] sm:$0xf]
  %v28 = vld [vmem:[%s0 + $0x4] sm:$0xf]
  %v29 = vld [vmem:[%s0 + $0x8] sm:$0xf]
  %v30 = vld [vmem:[%s0 + $0xc] sm:$0xf]
  %v31 = vld [vmem:[%s0 + $0x10] sm:$0xf]
  %v32 = vld [vmem:[%s0 + $0x14] sm:$0xf]
  %v33 = vld [vmem:[%s0 + $0x18] sm:$0xf]
  %v34 = vld [vmem:[%s0 + $0x1c] sm:$0xf]
  %v35 = vld [vmem:[%s0 + $0x20] sm:$0xf]
  %v36 = vld [vmem:[%s0 + $0x24] sm:$0xf]
  %v37 = vld [vmem:[%s0 + $0x28] sm:$0xf]
  %v38 = vld [vmem:[%s0 + $0x2c] sm:$0xf]
  %v39 = vld [vmem:[%s0 + $0x30] sm:$0xf]
  %v40 = vld [vmem:[%s0 + $0x34] sm:$0xf]
  %v41 = vld [vmem:[%s0 + $0x38] sm:$0xf]
  %v42 = vld [vmem:[%s0 + $0x3c] sm:$0xf]
  %v43 = vld [vmem:[%s2] sm:$0xf]
  %v44 = vld [vmem:[%s2 + $0x4] sm:$0xf]
  %v45 = vld [vmem:[%s2 + $0x8] sm:$0xf]
  %v46 = vld [vmem:[%s2 + $0xc] sm:$0xf]
  %v47 = vld [vmem:[%s2 + $0x10] sm:$0xf]
  %v48 = vld [vmem:[%s2 + $0x14] sm:$0xf]
  %v49 = vld [vmem:[%s2 + $0x18] sm:$0xf]
  %v50 = vld [vmem:[%s2 + $0x1c] sm:$0xf]
  %v51 = vld [vmem:[%s2 + $0x20] sm:$0xf]
  %v52 = vld [vmem:[%s2 + $0x24] sm:$0xf]
  %v53 = vld [vmem:[%s2 + $0x28] sm:$0xf]
  %v54 = vld [vmem:[%s2 + $0x2c] sm:$0xf]
  %v55 = vld [vmem:[%s2 + $0x30] sm:$0xf]
  %v56 = vld [vmem:[%s2 + $0x34] sm:$0xf]
  %v57 = vld [vmem:[%s2 + $0x38] sm:$0xf]
  %v58 = vld [vmem:[%s2 + $0x3c] sm:$0xf]
  %v59 = vld [vmem:[%s1] sm:$0xf]
  %v60 = vld [vmem:[%s1 + $0x4] sm:$0xf]
  %v61 = vld [vmem:[%s1 + $0x8] sm:$0xf]
  %v62 = vld [vmem:[%s1 + $0xc] sm:$0xf]
  %v63 = vld [vmem:[%s1 + $0x10] sm:$0xf]
  %v64 = vld [vmem:[%s1 + $0x14] sm:$0xf]
  %v65 = vld [vmem:[%s1 + $0x18] sm:$0xf]
  %v66 = vld [vmem:[%s1 + $0x1c] sm:$0xf]
  %v67 = vld [vmem:[%s1 + $0x20] sm:$0xf]
  %v68 = vld [vmem:[%s1 + $0x24] sm:$0xf]
  %v69 = vld [vmem:[%s1 + $0x28] sm:$0xf]
  %v70 = vld [vmem:[%s1 + $0x2c] sm:$0xf]
  %v71 = vld [vmem:[%s1 + $0x30] sm:$0xf]
  %v72 = vld [vmem:[%s1 + $0x34] sm:$0xf]
  %v73 = vld [vmem:[%s1 + $0x38] sm:$0xf]
  %v74 = vld [vmem:[%s1 + $0x3c] sm:$0xf]
  %v75 = vunpack.c.l.bf16 %v59
  %v76 = vunpack.c.l.bf16 %v60
  %v77 = vunpack.c.l.bf16 %v61
  %v78 = vunpack.c.l.bf16 %v62
  %v79 = vunpack.c.l.bf16 %v63
  %v80 = vunpack.c.l.bf16 %v64
  %v81 = vunpack.c.l.bf16 %v65
  %v82 = vunpack.c.l.bf16 %v66
  %v83 = vunpack.c.l.bf16 %v67
  %v84 = vunpack.c.l.bf16 %v68
  %v85 = vunpack.c.l.bf16 %v69
  %v86 = vunpack.c.l.bf16 %v70
  %v87 = vunpack.c.l.bf16 %v71
  %v88 = vunpack.c.l.bf16 %v72
  %v89 = vunpack.c.l.bf16 %v73
  %v90 = vunpack.c.l.bf16 %v74
  %v107 = vunpack.c.l.b16 %v27
  %v108 = vunpack.c.l.b16 %v28
  %v109 = vunpack.c.l.b16 %v29
  %v110 = vunpack.c.l.b16 %v30
  %v111 = vunpack.c.l.b16 %v31
  %v112 = vunpack.c.l.b16 %v32
  %v113 = vunpack.c.l.b16 %v33
  %v114 = vunpack.c.l.b16 %v34
  %v115 = vunpack.c.l.b16 %v35
  %v116 = vunpack.c.l.b16 %v36
  %v117 = vunpack.c.l.b16 %v37
  %v118 = vunpack.c.l.b16 %v38
  %v119 = vunpack.c.l.b16 %v39
  %v120 = vunpack.c.l.b16 %v40
  %v121 = vunpack.c.l.b16 %v41
  %v122 = vunpack.c.l.b16 %v42
  %v123 = vpack.c.b16 %v108, %v107
  %v124 = vpack.c.b16 %v110, %v109
  %v125 = vpack.c.b16 %v112, %v111
  %v126 = vpack.c.b16 %v114, %v113
  %v127 = vpack.c.b16 %v116, %v115
  %v128 = vpack.c.b16 %v118, %v117
  %v129 = vpack.c.b16 %v120, %v119
  %v130 = vpack.c.b16 %v122, %v121
  %v155 = vunpack.c.l.b16 %v43
  %v156 = vunpack.c.l.b16 %v44
  %v157 = vunpack.c.l.b16 %v45
  %v158 = vunpack.c.l.b16 %v46
  %v159 = vunpack.c.l.b16 %v47
  %v160 = vunpack.c.l.b16 %v48
  %v161 = vunpack.c.l.b16 %v49
  %v162 = vunpack.c.l.b16 %v50
  %v163 = vunpack.c.l.b16 %v51
  %v164 = vunpack.c.l.b16 %v52
  %v165 = vunpack.c.l.b16 %v53
  %v166 = vunpack.c.l.b16 %v54
  %v167 = vunpack.c.l.b16 %v55
  %v168 = vunpack.c.l.b16 %v56
  %v169 = vunpack.c.l.b16 %v57
  %v170 = vunpack.c.l.b16 %v58
  %v171 = vpack.c.b16 %v156, %v155
  %v172 = vpack.c.b16 %v158, %v157
  %v173 = vpack.c.b16 %v160, %v159
  %v174 = vpack.c.b16 %v162, %v161
  %v175 = vpack.c.b16 %v164, %v163
  %v176 = vpack.c.b16 %v166, %v165
  %v177 = vpack.c.b16 %v168, %v167
  %v178 = vpack.c.b16 %v170, %v169
  %187 = vmatprep.subr.bf16.mxu0 0
  %188 = vmatpush1.bf16.msra.mxu0 %v171
  %189 = vmatprep.subr.bf16.mxu0 0
  %190 = vmatpush1.bf16.msra.mxu0 %v172
  %191 = vmatprep.subr.bf16.mxu0 0
  %192 = vmatpush1.bf16.msra.mxu0 %v173
  %193 = vmatprep.subr.bf16.mxu0 0
  %194 = vmatpush1.bf16.msra.mxu0 %v174
  %195 = vmatprep.subr.bf16.mxu0 0
  %196 = vmatpush1.bf16.msra.mxu0 %v175
  %197 = vmatprep.subr.bf16.mxu0 0
  %198 = vmatpush1.bf16.msra.mxu0 %v176
  %199 = vmatprep.subr.bf16.mxu0 0
  %200 = vmatpush1.bf16.msra.mxu0 %v177
  %201 = vmatprep.subr.bf16.mxu0 0
  %202 = vmatpush1.bf16.msra.mxu0 %v178
  %203 = vmatprep.subr.bf16.mxu0 0
  %204 = vmatpush1.bf16.msra.mxu0 0
  %205 = vmatprep.subr.bf16.mxu0 0
  %206 = vmatpush1.bf16.msra.mxu0 0
  %207 = vmatprep.subr.bf16.mxu0 0
  %208 = vmatpush1.bf16.msra.mxu0 0
  %209 = vmatprep.subr.bf16.mxu0 0
  %210 = vmatpush1.bf16.msra.mxu0 0
  %211 = vmatprep.subr.bf16.mxu0 0
  %212 = vmatpush1.bf16.msra.mxu0 0
  %213 = vmatprep.subr.bf16.mxu0 0
  %214 = vmatpush1.bf16.msra.mxu0 0
  %215 = vmatprep.subr.bf16.mxu0 0
  %216 = vmatpush1.bf16.msra.mxu0 0
  %217 = vmatprep.subr.bf16.mxu0 0
  %218 = vmatpush1.bf16.msra.mxu0 0
  %219 = vmatprep.mubr.bf16.mxu0 0
  %220 = vmatmul.mubr.bf16.gmra.mrb[0].mxu0 %v123
  %v221 = vpop.f32.mrb[0].mxu0
  %v222 = vadd.f32 %v75, %v221
  %v223 = vpop.f32.mrb[0].mxu0
  %v224 = vpop.f32.mrb[0].mxu0
  %v225 = vadd.f32 %v76, %v224
  %v226 = vpop.f32.mrb[0].mxu0
  %227 = vmatprep.mubr.bf16.mxu0 0
  %228 = vmatmul.mubr.bf16.gmra.mrb[0].mxu0 %v124
  %v229 = vpop.f32.mrb[0].mxu0
  %v230 = vadd.f32 %v77, %v229
  %v231 = vpop.f32.mrb[0].mxu0
  %v232 = vpop.f32.mrb[0].mxu0
  %v233 = vadd.f32 %v78, %v232
  %v234 = vpop.f32.mrb[0].mxu0
  %235 = vmatprep.mubr.bf16.mxu0 0
  %236 = vmatmul.mubr.bf16.gmra.mrb[0].mxu0 %v125
  %v237 = vpop.f32.mrb[0].mxu0
  %v238 = vadd.f32 %v79, %v237
  %v239 = vpop.f32.mrb[0].mxu0
  %v240 = vpop.f32.mrb[0].mxu0
  %v241 = vadd.f32 %v80, %v240
  %v242 = vpop.f32.mrb[0].mxu0
  %243 = vmatprep.mubr.bf16.mxu0 0
  %244 = vmatmul.mubr.bf16.gmra.mrb[0].mxu0 %v126
  %v245 = vpop.f32.mrb[0].mxu0
  %v246 = vadd.f32 %v81, %v245
  %v247 = vpop.f32.mrb[0].mxu0
  %v248 = vpop.f32.mrb[0].mxu0
  %v249 = vadd.f32 %v82, %v248
  %v250 = vpop.f32.mrb[0].mxu0
  %251 = vmatprep.mubr.bf16.mxu0 0
  %252 = vmatmul.mubr.bf16.gmra.mrb[0].mxu0 %v127
  %v253 = vpop.f32.mrb[0].mxu0
  %v254 = vadd.f32 %v83, %v253
  %v255 = vpop.f32.mrb[0].mxu0
  %v256 = vpop.f32.mrb[0].mxu0
  %v257 = vadd.f32 %v84, %v256
  %v258 = vpop.f32.mrb[0].mxu0
  %259 = vmatprep.mubr.bf16.mxu0 0
  %260 = vmatmul.mubr.bf16.gmra.mrb[0].mxu0 %v128
  %v261 = vpop.f32.mrb[0].mxu0
  %v262 = vadd.f32 %v85, %v261
  %v263 = vpop.f32.mrb[0].mxu0
  %v264 = vpop.f32.mrb[0].mxu0
  %v265 = vadd.f32 %v86, %v264
  %v266 = vpop.f32.mrb[0].mxu0
  %267 = vmatprep.mubr.bf16.mxu0 0
  %268 = vmatmul.mubr.bf16.gmra.mrb[0].mxu0 %v129
  %v269 = vpop.f32.mrb[0].mxu0
  %v270 = vadd.f32 %v87, %v269
  %v271 = vpop.f32.mrb[0].mxu0
  %v272 = vpop.f32.mrb[0].mxu0
  %v273 = vadd.f32 %v88, %v272
  %v274 = vpop.f32.mrb[0].mxu0
  %275 = vmatprep.mubr.bf16.mxu0 0
  %276 = vmatmul.mubr.bf16.gmra.mrb[0].mxu0 %v130
  %v277 = vpop.f32.mrb[0].mxu0
  %v278 = vadd.f32 %v89, %v277
  %v279 = vpop.f32.mrb[0].mxu0
  %v280 = vpop.f32.mrb[0].mxu0
  %v281 = vadd.f32 %v90, %v280
  %v282 = vpop.f32.mrb[0].mxu0
  %283 = vdwg.mxu0
  %v284 = vsub.f32 0.0, %v222
  %v285 = vsub.f32 0.0, %v225
  %v286 = vsub.f32 0.0, %v230
  %v287 = vsub.f32 0.0, %v233
  %v288 = vsub.f32 0.0, %v238
  %v289 = vsub.f32 0.0, %v241
  %v290 = vsub.f32 0.0, %v246
  %v291 = vsub.f32 0.0, %v249
  %v292 = vsub.f32 0.0, %v254
  %v293 = vsub.f32 0.0, %v257
  %v294 = vsub.f32 0.0, %v262
  %v295 = vsub.f32 0.0, %v265
  %v296 = vsub.f32 0.0, %v270
  %v297 = vsub.f32 0.0, %v273
  %v298 = vsub.f32 0.0, %v278
  %v299 = vsub.f32 0.0, %v281
  %v300 = vmul.f32 %v284, 1.442695
  %v301 = vpow.pop %v300
  %v302 = vmul.f32 %v285, 1.442695
  %v303 = vpow.pop %v302
  %v304 = vmul.f32 %v286, 1.442695
  %v305 = vpow.pop %v304
  %v306 = vmul.f32 %v287, 1.442695
  %v307 = vpow.pop %v306
  %v308 = vmul.f32 %v288, 1.442695
  %v309 = vpow.pop %v308
  %v310 = vmul.f32 %v289, 1.442695
  %v311 = vpow.pop %v310
  %v312 = vmul.f32 %v290, 1.442695
  %v313 = vpow.pop %v312
  %v314 = vmul.f32 %v291, 1.442695
  %v315 = vpow.pop %v314
  %v316 = vmul.f32 %v292, 1.442695
  %v317 = vpow.pop %v316
  %v318 = vmul.f32 %v293, 1.442695
  %v319 = vpow.pop %v318
  %v320 = vmul.f32 %v294, 1.442695
  %v321 = vpow.pop %v320
  %v322 = vmul.f32 %v295, 1.442695
  %v323 = vpow.pop %v322
  %v324 = vmul.f32 %v296, 1.442695
  %v325 = vpow.pop %v324
  %v326 = vmul.f32 %v297, 1.442695
  %v327 = vpow.pop %v326
  %v328 = vmul.f32 %v298, 1.442695
  %v329 = vpow.pop %v328
  %v330 = vmul.f32 %v299, 1.442695
  %v331 = vpow.pop %v330
  %v332 = vadd.f32 %v301, 1.0
  %v333 = vadd.f32 %v303, 1.0
  %v334 = vadd.f32 %v305, 1.0
  %v335 = vadd.f32 %v307, 1.0
  %v336 = vadd.f32 %v309, 1.0
  %v337 = vadd.f32 %v311, 1.0
  %v338 = vadd.f32 %v313, 1.0
  %v339 = vadd.f32 %v315, 1.0
  %v340 = vadd.f32 %v317, 1.0
  %v341 = vadd.f32 %v319, 1.0
  %v342 = vadd.f32 %v321, 1.0
  %v343 = vadd.f32 %v323, 1.0
  %v344 = vadd.f32 %v325, 1.0
  %v345 = vadd.f32 %v327, 1.0
  %v346 = vadd.f32 %v329, 1.0
  %v347 = vadd.f32 %v331, 1.0
  %v348 = vrcp.pop %v332
  %v349 = vmul.f32 %v222, %v348
  %v350 = vrcp.pop %v333
  %v351 = vmul.f32 %v225, %v350
  %v352 = vrcp.pop %v334
  %v353 = vmul.f32 %v230, %v352
  %v354 = vrcp.pop %v335
  %v355 = vmul.f32 %v233, %v354
  %v356 = vrcp.pop %v336
  %v357 = vmul.f32 %v238, %v356
  %v358 = vrcp.pop %v337
  %v359 = vmul.f32 %v241, %v358
  %v360 = vrcp.pop %v338
  %v361 = vmul.f32 %v246, %v360
  %v362 = vrcp.pop %v339
  %v363 = vmul.f32 %v249, %v362
  %v364 = vrcp.pop %v340
  %v365 = vmul.f32 %v254, %v364
  %v366 = vrcp.pop %v341
  %v367 = vmul.f32 %v257, %v366
  %v368 = vrcp.pop %v342
  %v369 = vmul.f32 %v262, %v368
  %v370 = vrcp.pop %v343
  %v371 = vmul.f32 %v265, %v370
  %v372 = vrcp.pop %v344
  %v373 = vmul.f32 %v270, %v372
  %v374 = vrcp.pop %v345
  %v375 = vmul.f32 %v273, %v374
  %v376 = vrcp.pop %v346
  %v377 = vmul.f32 %v278, %v376
  %v378 = vrcp.pop %v347
  %v379 = vmul.f32 %v281, %v378
  %v380 = vpack.c.bf16 %v351, %v349
  %v381 = vpack.c.bf16 %v355, %v353
  %v382 = vpack.c.bf16 %v359, %v357
  %v383 = vpack.c.bf16 %v363, %v361
  %v384 = vpack.c.bf16 %v367, %v365
  %v385 = vpack.c.bf16 %v371, %v369
  %v386 = vpack.c.bf16 %v375, %v373
  %v387 = vpack.c.bf16 %v379, %v377
  %v388 = vld [vmem:[%s3] sm:$0xf]
  %v389 = vld [vmem:[%s3 + $0x4] sm:$0xf]
  %v390 = vld [vmem:[%s3 + $0x8] sm:$0xf]
  %v391 = vld [vmem:[%s3 + $0xc] sm:$0xf]
  %v392 = vld [vmem:[%s3 + $0x10] sm:$0xf]
  %v393 = vld [vmem:[%s3 + $0x14] sm:$0xf]
  %v394 = vld [vmem:[%s3 + $0x18] sm:$0xf]
  %v395 = vld [vmem:[%s3 + $0x1c] sm:$0xf]
  %v396 = vld [vmem:[%s3 + $0x20] sm:$0xf]
  %v397 = vld [vmem:[%s3 + $0x24] sm:$0xf]
  %v398 = vld [vmem:[%s3 + $0x28] sm:$0xf]
  %v399 = vld [vmem:[%s3 + $0x2c] sm:$0xf]
  %v400 = vld [vmem:[%s3 + $0x30] sm:$0xf]
  %v401 = vld [vmem:[%s3 + $0x34] sm:$0xf]
  %v402 = vld [vmem:[%s3 + $0x38] sm:$0xf]
  %v403 = vld [vmem:[%s3 + $0x3c] sm:$0xf]
  %v404 = vld [vmem:[%s4] sm:$0x1]
  %v406 = vlaneseq
  %v407 = vshrl.u32 %v406, 7
  %v408 = vsub.s32 0, %v407
  %v409 = vrot.slane %v404, %v408
  %v427 = vunpack.c.l.b16 %v388
  %v428 = vunpack.c.l.b16 %v389
  %v429 = vunpack.c.l.b16 %v390
  %v430 = vunpack.c.l.b16 %v391
  %v431 = vunpack.c.l.b16 %v392
  %v432 = vunpack.c.l.b16 %v393
  %v433 = vunpack.c.l.b16 %v394
  %v434 = vunpack.c.l.b16 %v395
  %v435 = vunpack.c.l.b16 %v396
  %v436 = vunpack.c.l.b16 %v397
  %v437 = vunpack.c.l.b16 %v398
  %v438 = vunpack.c.l.b16 %v399
  %v439 = vunpack.c.l.b16 %v400
  %v440 = vunpack.c.l.b16 %v401
  %v441 = vunpack.c.l.b16 %v402
  %v442 = vunpack.c.l.b16 %v403
  %v443 = vpack.c.b16 %v428, %v427
  %v444 = vpack.c.b16 %v430, %v429
  %v445 = vpack.c.b16 %v432, %v431
  %v446 = vpack.c.b16 %v434, %v433
  %v447 = vpack.c.b16 %v436, %v435
  %v448 = vpack.c.b16 %v438, %v437
  %v449 = vpack.c.b16 %v440, %v439
  %v450 = vpack.c.b16 %v442, %v441
  %459 = vmatprep.subr.bf16.mxu0 0
  %460 = vmatpush1.bf16.msra.mxu0 %v443
  %461 = vmatprep.subr.bf16.mxu0 0
  %462 = vmatpush1.bf16.msra.mxu0 %v444
  %463 = vmatprep.subr.bf16.mxu0 0
  %464 = vmatpush1.bf16.msra.mxu0 %v445
  %465 = vmatprep.subr.bf16.mxu0 0
  %466 = vmatpush1.bf16.msra.mxu0 %v446
  %467 = vmatprep.subr.bf16.mxu0 0
  %468 = vmatpush1.bf16.msra.mxu0 %v447
  %469 = vmatprep.subr.bf16.mxu0 0
  %470 = vmatpush1.bf16.msra.mxu0 %v448
  %471 = vmatprep.subr.bf16.mxu0 0
  %472 = vmatpush1.bf16.msra.mxu0 %v449
  %473 = vmatprep.subr.bf16.mxu0 0
  %474 = vmatpush1.bf16.msra.mxu0 %v450
  %475 = vmatprep.subr.bf16.mxu0 0
  %476 = vmatpush1.bf16.msra.mxu0 0
  %477 = vmatprep.subr.bf16.mxu0 0
  %478 = vmatpush1.bf16.msra.mxu0 0
  %479 = vmatprep.subr.bf16.mxu0 0
  %480 = vmatpush1.bf16.msra.mxu0 0
  %481 = vmatprep.subr.bf16.mxu0 0
  %482 = vmatpush1.bf16.msra.mxu0 0
  %483 = vmatprep.subr.bf16.mxu0 0
  %484 = vmatpush1.bf16.msra.mxu0 0
  %485 = vmatprep.subr.bf16.mxu0 0
  %486 = vmatpush1.bf16.msra.mxu0 0
  %487 = vmatprep.subr.bf16.mxu0 0
  %488 = vmatpush1.bf16.msra.mxu0 0
  %489 = vmatprep.subr.bf16.mxu0 0
  %490 = vmatpush1.bf16.msra.mxu0 0
  %491 = vmatprep.mubr.bf16.mxu0 0
  %492 = vmatmul.mubr.bf16.gmra.mrb[0].mxu0 %v380
  %v493 = vpop.f32.mrb[0].mxu0
  %v494 = vadd.f32 %v409, %v493
  %v495 = vpop.f32.mrb[0].mxu0
  %v496 = vpop.f32.mrb[0].mxu0
  %v497 = vadd.f32 %v409, %v496
  %v498 = vpop.f32.mrb[0].mxu0
  %499 = vmatprep.mubr.bf16.mxu0 0
  %500 = vmatmul.mubr.bf16.gmra.mrb[0].mxu0 %v381
  %v501 = vpop.f32.mrb[0].mxu0
  %v502 = vadd.f32 %v409, %v501
  %v503 = vpop.f32.mrb[0].mxu0
  %v504 = vpop.f32.mrb[0].mxu0
  %v505 = vadd.f32 %v409, %v504
  %v506 = vpop.f32.mrb[0].mxu0
  %507 = vmatprep.mubr.bf16.mxu0 0
  %508 = vmatmul.mubr.bf16.gmra.mrb[0].mxu0 %v382
  %v509 = vpop.f32.mrb[0].mxu0
  %v510 = vadd.f32 %v409, %v509
  %v511 = vpop.f32.mrb[0].mxu0
  %v512 = vpop.f32.mrb[0].mxu0
  %v513 = vadd.f32 %v409, %v512
  %v514 = vpop.f32.mrb[0].mxu0
  %515 = vmatprep.mubr.bf16.mxu0 0
  %516 = vmatmul.mubr.bf16.gmra.mrb[0].mxu0 %v383
  %v517 = vpop.f32.mrb[0].mxu0
  %v518 = vadd.f32 %v409, %v517
  %v519 = vpop.f32.mrb[0].mxu0
  %v520 = vpop.f32.mrb[0].mxu0
  %v521 = vadd.f32 %v409, %v520
  %v522 = vpop.f32.mrb[0].mxu0
  %523 = vmatprep.mubr.bf16.mxu0 0
  %524 = vmatmul.mubr.bf16.gmra.mrb[0].mxu0 %v384
  %v525 = vpop.f32.mrb[0].mxu0
  %v526 = vadd.f32 %v409, %v525
  %v527 = vpop.f32.mrb[0].mxu0
  %v528 = vpop.f32.mrb[0].mxu0
  %v529 = vadd.f32 %v409, %v528
  %v530 = vpop.f32.mrb[0].mxu0
  %531 = vmatprep.mubr.bf16.mxu0 0
  %532 = vmatmul.mubr.bf16.gmra.mrb[0].mxu0 %v385
  %v533 = vpop.f32.mrb[0].mxu0
  %v534 = vadd.f32 %v409, %v533
  %v535 = vpop.f32.mrb[0].mxu0
  %v536 = vpop.f32.mrb[0].mxu0
  %v537 = vadd.f32 %v409, %v536
  %v538 = vpop.f32.mrb[0].mxu0
  %539 = vmatprep.mubr.bf16.mxu0 0
  %540 = vmatmul.mubr.bf16.gmra.mrb[0].mxu0 %v386
  %v541 = vpop.f32.mrb[0].mxu0
  %v542 = vadd.f32 %v409, %v541
  %v543 = vpop.f32.mrb[0].mxu0
  %v544 = vpop.f32.mrb[0].mxu0
  %v545 = vadd.f32 %v409, %v544
  %v546 = vpop.f32.mrb[0].mxu0
  %547 = vmatprep.mubr.bf16.mxu0 0
  %548 = vmatmul.mubr.bf16.gmra.mrb[0].mxu0 %v387
  %v549 = vpop.f32.mrb[0].mxu0
  %v550 = vadd.f32 %v409, %v549
  %v551 = vpop.f32.mrb[0].mxu0
  %v552 = vpop.f32.mrb[0].mxu0
  %v553 = vadd.f32 %v409, %v552
  %v554 = vpop.f32.mrb[0].mxu0
  %555 = vdwg.mxu0
  %v556 = vsub.f32 0.0, %v494
  %v557 = vsub.f32 0.0, %v497
  %v558 = vsub.f32 0.0, %v502
  %v559 = vsub.f32 0.0, %v505
  %v560 = vsub.f32 0.0, %v510
  %v561 = vsub.f32 0.0, %v513
  %v562 = vsub.f32 0.0, %v518
  %v563 = vsub.f32 0.0, %v521
  %v564 = vsub.f32 0.0, %v526
  %v565 = vsub.f32 0.0, %v529
  %v566 = vsub.f32 0.0, %v534
  %v567 = vsub.f32 0.0, %v537
  %v568 = vsub.f32 0.0, %v542
  %v569 = vsub.f32 0.0, %v545
  %v570 = vsub.f32 0.0, %v550
  %v571 = vsub.f32 0.0, %v553
  %v572 = vmul.f32 %v556, 1.442695
  %v573 = vpow.pop %v572
  %v574 = vmul.f32 %v557, 1.442695
  %v575 = vpow.pop %v574
  %v576 = vmul.f32 %v558, 1.442695
  %v577 = vpow.pop %v576
  %v578 = vmul.f32 %v559, 1.442695
  %v579 = vpow.pop %v578
  %v580 = vmul.f32 %v560, 1.442695
  %v581 = vpow.pop %v580
  %v582 = vmul.f32 %v561, 1.442695
  %v583 = vpow.pop %v582
  %v584 = vmul.f32 %v562, 1.442695
  %v585 = vpow.pop %v584
  %v586 = vmul.f32 %v563, 1.442695
  %v587 = vpow.pop %v586
  %v588 = vmul.f32 %v564, 1.442695
  %v589 = vpow.pop %v588
  %v590 = vmul.f32 %v565, 1.442695
  %v591 = vpow.pop %v590
  %v592 = vmul.f32 %v566, 1.442695
  %v593 = vpow.pop %v592
  %v594 = vmul.f32 %v567, 1.442695
  %v595 = vpow.pop %v594
  %v596 = vmul.f32 %v568, 1.442695
  %v597 = vpow.pop %v596
  %v598 = vmul.f32 %v569, 1.442695
  %v599 = vpow.pop %v598
  %v600 = vmul.f32 %v570, 1.442695
  %v601 = vpow.pop %v600
  %v602 = vmul.f32 %v571, 1.442695
  %v603 = vpow.pop %v602
  %v604 = vadd.f32 %v573, 1.0
  %v605 = vadd.f32 %v575, 1.0
  %v606 = vadd.f32 %v577, 1.0
  %v607 = vadd.f32 %v579, 1.0
  %v608 = vadd.f32 %v581, 1.0
  %v609 = vadd.f32 %v583, 1.0
  %v610 = vadd.f32 %v585, 1.0
  %v611 = vadd.f32 %v587, 1.0
  %v612 = vadd.f32 %v589, 1.0
  %v613 = vadd.f32 %v591, 1.0
  %v614 = vadd.f32 %v593, 1.0
  %v615 = vadd.f32 %v595, 1.0
  %v616 = vadd.f32 %v597, 1.0
  %v617 = vadd.f32 %v599, 1.0
  %v618 = vadd.f32 %v601, 1.0
  %v619 = vadd.f32 %v603, 1.0
  %v620 = vrcp.pop %v604
  %v621 = vmul.f32 %v494, %v620
  %v622 = vrcp.pop %v605
  %v623 = vmul.f32 %v497, %v622
  %v624 = vrcp.pop %v606
  %v625 = vmul.f32 %v502, %v624
  %v626 = vrcp.pop %v607
  %v627 = vmul.f32 %v505, %v626
  %v628 = vrcp.pop %v608
  %v629 = vmul.f32 %v510, %v628
  %v630 = vrcp.pop %v609
  %v631 = vmul.f32 %v513, %v630
  %v632 = vrcp.pop %v610
  %v633 = vmul.f32 %v518, %v632
  %v634 = vrcp.pop %v611
  %v635 = vmul.f32 %v521, %v634
  %v636 = vrcp.pop %v612
  %v637 = vmul.f32 %v526, %v636
  %v638 = vrcp.pop %v613
  %v639 = vmul.f32 %v529, %v638
  %v640 = vrcp.pop %v614
  %v641 = vmul.f32 %v534, %v640
  %v642 = vrcp.pop %v615
  %v643 = vmul.f32 %v537, %v642
  %v644 = vrcp.pop %v616
  %v645 = vmul.f32 %v542, %v644
  %v646 = vrcp.pop %v617
  %v647 = vmul.f32 %v545, %v646
  %v648 = vrcp.pop %v618
  %v649 = vmul.f32 %v550, %v648
  %v650 = vrcp.pop %v619
  %v651 = vmul.f32 %v553, %v650
  %v652 = vpack.c.bf16 %v623, %v621
  %v653 = vpack.c.bf16 %v627, %v625
  %v654 = vpack.c.bf16 %v631, %v629
  %v655 = vpack.c.bf16 %v635, %v633
  %v656 = vpack.c.bf16 %v639, %v637
  %v657 = vpack.c.bf16 %v643, %v641
  %v658 = vpack.c.bf16 %v647, %v645
  %v659 = vpack.c.bf16 %v651, %v649
  %v660 = vld [vmem:[%s5] sm:$0xf]
  %v661 = vld [vmem:[%s5 + $0x4] sm:$0xf]
  %v662 = vld [vmem:[%s5 + $0x8] sm:$0xf]
  %v663 = vld [vmem:[%s5 + $0xc] sm:$0xf]
  %v664 = vld [vmem:[%s5 + $0x10] sm:$0xf]
  %v665 = vld [vmem:[%s5 + $0x14] sm:$0xf]
  %v666 = vld [vmem:[%s5 + $0x18] sm:$0xf]
  %v667 = vld [vmem:[%s5 + $0x1c] sm:$0xf]
  %v668 = vld [vmem:[%s5 + $0x20] sm:$0xf]
  %v669 = vld [vmem:[%s5 + $0x24] sm:$0xf]
  %v670 = vld [vmem:[%s5 + $0x28] sm:$0xf]
  %v671 = vld [vmem:[%s5 + $0x2c] sm:$0xf]
  %v672 = vld [vmem:[%s5 + $0x30] sm:$0xf]
  %v673 = vld [vmem:[%s5 + $0x34] sm:$0xf]
  %v674 = vld [vmem:[%s5 + $0x38] sm:$0xf]
  %v675 = vld [vmem:[%s5 + $0x3c] sm:$0xf]
  %v676 = vld [vmem:[%s6] sm:$0x1]
  %v678 = vlaneseq
  %v679 = vshrl.u32 %v678, 7
  %v680 = vsub.s32 0, %v679
  %v681 = vrot.slane %v676, %v680
  %v699 = vunpack.c.l.b16 %v660
  %v700 = vunpack.c.l.b16 %v661
  %v701 = vunpack.c.l.b16 %v662
  %v702 = vunpack.c.l.b16 %v663
  %v703 = vunpack.c.l.b16 %v664
  %v704 = vunpack.c.l.b16 %v665
  %v705 = vunpack.c.l.b16 %v666
  %v706 = vunpack.c.l.b16 %v667
  %v707 = vunpack.c.l.b16 %v668
  %v708 = vunpack.c.l.b16 %v669
  %v709 = vunpack.c.l.b16 %v670
  %v710 = vunpack.c.l.b16 %v671
  %v711 = vunpack.c.l.b16 %v672
  %v712 = vunpack.c.l.b16 %v673
  %v713 = vunpack.c.l.b16 %v674
  %v714 = vunpack.c.l.b16 %v675
  %v715 = vpack.c.b16 %v700, %v699
  %v716 = vpack.c.b16 %v702, %v701
  %v717 = vpack.c.b16 %v704, %v703
  %v718 = vpack.c.b16 %v706, %v705
  %v719 = vpack.c.b16 %v708, %v707
  %v720 = vpack.c.b16 %v710, %v709
  %v721 = vpack.c.b16 %v712, %v711
  %v722 = vpack.c.b16 %v714, %v713
  %731 = vmatprep.subr.bf16.mxu0 0
  %732 = vmatpush1.bf16.msra.mxu0 %v715
  %733 = vmatprep.subr.bf16.mxu0 0
  %734 = vmatpush1.bf16.msra.mxu0 %v716
  %735 = vmatprep.subr.bf16.mxu0 0
  %736 = vmatpush1.bf16.msra.mxu0 %v717
  %737 = vmatprep.subr.bf16.mxu0 0
  %738 = vmatpush1.bf16.msra.mxu0 %v718
  %739 = vmatprep.subr.bf16.mxu0 0
  %740 = vmatpush1.bf16.msra.mxu0 %v719
  %741 = vmatprep.subr.bf16.mxu0 0
  %742 = vmatpush1.bf16.msra.mxu0 %v720
  %743 = vmatprep.subr.bf16.mxu0 0
  %744 = vmatpush1.bf16.msra.mxu0 %v721
  %745 = vmatprep.subr.bf16.mxu0 0
  %746 = vmatpush1.bf16.msra.mxu0 %v722
  %747 = vmatprep.subr.bf16.mxu0 0
  %748 = vmatpush1.bf16.msra.mxu0 0
  %749 = vmatprep.subr.bf16.mxu0 0
  %750 = vmatpush1.bf16.msra.mxu0 0
  %751 = vmatprep.subr.bf16.mxu0 0
  %752 = vmatpush1.bf16.msra.mxu0 0
  %753 = vmatprep.subr.bf16.mxu0 0
  %754 = vmatpush1.bf16.msra.mxu0 0
  %755 = vmatprep.subr.bf16.mxu0 0
  %756 = vmatpush1.bf16.msra.mxu0 0
  %757 = vmatprep.subr.bf16.mxu0 0
  %758 = vmatpush1.bf16.msra.mxu0 0
  %759 = vmatprep.subr.bf16.mxu0 0
  %760 = vmatpush1.bf16.msra.mxu0 0
  %761 = vmatprep.subr.bf16.mxu0 0
  %762 = vmatpush1.bf16.msra.mxu0 0
  %763 = vmatprep.mubr.bf16.mxu0 0
  %764 = vmatmul.mubr.bf16.gmra.mrb[0].mxu0 %v652
  %v765 = vpop.f32.mrb[0].mxu0
  %v766 = vadd.f32 %v681, %v765
  %v767 = vpop.f32.mrb[0].mxu0
  %v768 = vpop.f32.mrb[0].mxu0
  %v769 = vadd.f32 %v681, %v768
  %v770 = vpop.f32.mrb[0].mxu0
  %771 = vmatprep.mubr.bf16.mxu0 0
  %772 = vmatmul.mubr.bf16.gmra.mrb[0].mxu0 %v653
  %v773 = vpop.f32.mrb[0].mxu0
  %v774 = vadd.f32 %v681, %v773
  %v775 = vpop.f32.mrb[0].mxu0
  %v776 = vpop.f32.mrb[0].mxu0
  %v777 = vadd.f32 %v681, %v776
  %v778 = vpop.f32.mrb[0].mxu0
  %779 = vmatprep.mubr.bf16.mxu0 0
  %780 = vmatmul.mubr.bf16.gmra.mrb[0].mxu0 %v654
  %v781 = vpop.f32.mrb[0].mxu0
  %v782 = vadd.f32 %v681, %v781
  %v783 = vpop.f32.mrb[0].mxu0
  %v784 = vpop.f32.mrb[0].mxu0
  %v785 = vadd.f32 %v681, %v784
  %v786 = vpop.f32.mrb[0].mxu0
  %787 = vmatprep.mubr.bf16.mxu0 0
  %788 = vmatmul.mubr.bf16.gmra.mrb[0].mxu0 %v655
  %v789 = vpop.f32.mrb[0].mxu0
  %v790 = vadd.f32 %v681, %v789
  %v791 = vpop.f32.mrb[0].mxu0
  %v792 = vpop.f32.mrb[0].mxu0
  %v793 = vadd.f32 %v681, %v792
  %v794 = vpop.f32.mrb[0].mxu0
  %795 = vmatprep.mubr.bf16.mxu0 0
  %796 = vmatmul.mubr.bf16.gmra.mrb[0].mxu0 %v656
  %v797 = vpop.f32.mrb[0].mxu0
  %v798 = vadd.f32 %v681, %v797
  %v799 = vpop.f32.mrb[0].mxu0
  %v800 = vpop.f32.mrb[0].mxu0
  %v801 = vadd.f32 %v681, %v800
  %v802 = vpop.f32.mrb[0].mxu0
  %803 = vmatprep.mubr.bf16.mxu0 0
  %804 = vmatmul.mubr.bf16.gmra.mrb[0].mxu0 %v657
  %v805 = vpop.f32.mrb[0].mxu0
  %v806 = vadd.f32 %v681, %v805
  %v807 = vpop.f32.mrb[0].mxu0
  %v808 = vpop.f32.mrb[0].mxu0
  %v809 = vadd.f32 %v681, %v808
  %v810 = vpop.f32.mrb[0].mxu0
  %811 = vmatprep.mubr.bf16.mxu0 0
  %812 = vmatmul.mubr.bf16.gmra.mrb[0].mxu0 %v658
  %v813 = vpop.f32.mrb[0].mxu0
  %v814 = vadd.f32 %v681, %v813
  %v815 = vpop.f32.mrb[0].mxu0
  %v816 = vpop.f32.mrb[0].mxu0
  %v817 = vadd.f32 %v681, %v816
  %v818 = vpop.f32.mrb[0].mxu0
  %819 = vmatprep.mubr.bf16.mxu0 0
  %820 = vmatmul.mubr.bf16.gmra.mrb[0].mxu0 %v659
  %v821 = vpop.f32.mrb[0].mxu0
  %v822 = vadd.f32 %v681, %v821
  %v823 = vpop.f32.mrb[0].mxu0
  %v824 = vpop.f32.mrb[0].mxu0
  %v825 = vadd.f32 %v681, %v824
  %v826 = vpop.f32.mrb[0].mxu0
  %827 = vdwg.mxu0
  %v828 = vpack.c.bf16 %v769, %v766
  %v829 = vpack.c.bf16 %v777, %v774
  %v830 = vpack.c.bf16 %v785, %v782
  %v831 = vpack.c.bf16 %v793, %v790
  %v832 = vpack.c.bf16 %v801, %v798
  %v833 = vpack.c.bf16 %v809, %v806
  %v834 = vpack.c.bf16 %v817, %v814
  %v835 = vpack.c.bf16 %v825, %v822
  %v844 = vunpack.c.l.b16 %v828
  %v845 = vunpack.c.h.b16 %v828
  %v846 = vunpack.c.l.b16 %v829
  %v847 = vunpack.c.h.b16 %v829
  %v848 = vunpack.c.l.b16 %v830
  %v849 = vunpack.c.h.b16 %v830
  %v850 = vunpack.c.l.b16 %v831
  %v851 = vunpack.c.h.b16 %v831
  %v852 = vunpack.c.l.b16 %v832
  %v853 = vunpack.c.h.b16 %v832
  %v854 = vunpack.c.l.b16 %v833
  %v855 = vunpack.c.h.b16 %v833
  %v856 = vunpack.c.l.b16 %v834
  %v857 = vunpack.c.h.b16 %v834
  %v858 = vunpack.c.l.b16 %v835
  %v859 = vunpack.c.h.b16 %v835
  %v860 = vpack.c.b16 %v844, %v844
  %v861 = vpack.c.b16 %v845, %v845
  %v862 = vpack.c.b16 %v846, %v846
  %v863 = vpack.c.b16 %v847, %v847
  %v864 = vpack.c.b16 %v848, %v848
  %v865 = vpack.c.b16 %v849, %v849
  %v866 = vpack.c.b16 %v850, %v850
  %v867 = vpack.c.b16 %v851, %v851
  %v868 = vpack.c.b16 %v852, %v852
  %v869 = vpack.c.b16 %v853, %v853
  %v870 = vpack.c.b16 %v854, %v854
  %v871 = vpack.c.b16 %v855, %v855
  %v872 = vpack.c.b16 %v856, %v856
  %v873 = vpack.c.b16 %v857, %v857
  %v874 = vpack.c.b16 %v858, %v858
  %v875 = vpack.c.b16 %v859, %v859
  %892 = vst [vmem:[%s7] sm:$0xf] %v860
  %893 = vst [vmem:[%s7 + $0x4] sm:$0xf] %v861
  %894 = vst [vmem:[%s7 + $0x8] sm:$0xf] %v862
  %895 = vst [vmem:[%s7 + $0xc] sm:$0xf] %v863
  %896 = vst [vmem:[%s7 + $0x10] sm:$0xf] %v864
  %897 = vst [vmem:[%s7 + $0x14] sm:$0xf] %v865
  %898 = vst [vmem:[%s7 + $0x18] sm:$0xf] %v866
  %899 = vst [vmem:[%s7 + $0x1c] sm:$0xf] %v867
  %900 = vst [vmem:[%s7 + $0x20] sm:$0xf] %v868
  %901 = vst [vmem:[%s7 + $0x24] sm:$0xf] %v869
  %902 = vst [vmem:[%s7 + $0x28] sm:$0xf] %v870
  %903 = vst [vmem:[%s7 + $0x2c] sm:$0xf] %v871
  %904 = vst [vmem:[%s7 + $0x30] sm:$0xf] %v872
  %905 = vst [vmem:[%s7 + $0x34] sm:$0xf] %v873
  %906 = vst [vmem:[%s7 + $0x38] sm:$0xf] %v874
  %907 = vst [vmem:[%s7 + $0x3c] sm:$0xf] %v875
  // Predicated region
  $region30: #{csp_diffusion_forward.4} parent=0 // pred_check
    _
  $region31: #{csp_diffusion_forward.4} parent=0 // pred_check_branch
    %909 = sbr.rel (0) target = $region33
  $region32: #{csp_diffusion_forward.4} parent=0 // pred_region
    _
  $region33: #{csp_diffusion_forward.4} parent=0 // pred_fallthru
    _
  // Predicated region
  $region34: #{csp_diffusion_forward.4} parent=0 // pred_check
    _
  $region35: #{csp_diffusion_forward.4} parent=0 // pred_check_branch
    %911 = sbr.rel (0) target = $region37
  $region36: #{csp_diffusion_forward.4} parent=0 // pred_region
    _
  $region37: #{csp_diffusion_forward.4} parent=0 // pred_fallthru
    _

// kernel: csp_diffusion_forward.5
$region0: #{csp_diffusion_forward.5}
  #allocation0 [shape = 'u32[]', space=smem, size = 0x4, offset = 0x4, fixed_abs, tag = 'smem constant byte address 0x4 - core index']
  #allocation1 [shape = 'u32[144,128]{1,0:T(1,128)}', space=vmem, size = 0x12000, scoped, tag = 'internal scratch']
  %s0 = inlined_call_operand.vmem [shape: f32[8,128], index: 0, kind: input, shape index: {}]
  %s1 = inlined_call_operand.vmem [shape: f32[8,128], index: 1, kind: input, shape index: {}]
  %s2 = inlined_call_operand.vmem [shape: f32[8,128], index: 2, kind: input, shape index: {}]
  %s3 = inlined_call_operand.vmem [shape: f32[8,128], index: 3, kind: input, shape index: {}]
  %s4 = inlined_call_operand.hbm [shape: f32[1,1], index: 4, kind: output, shape index: {}]
  %s5 = sld [smem:[#allocation0]]
  $region26: #{csp_diffusion_forward.5} parent=0
    _
  %s7 = ssub.s32 1, %s5
  %s8 = scalar_select 0, %s7, %s5
  $region1: #{csp_diffusion_forward.5} parent=0
    #allocation2 [shape = 'u8[512]{0}', space=vmem, size = 0x400, scoped, tag = 'output window, operand 0, single buffered']
    #allocation3 [shape = 's32[1]{0}', space=sflag, size = 0x4, scoped, tag = 'scoped memory for csp_diffusion_forward.5']
    %9 = vsyncpa [#allocation3], 0
    // Predicated region
    $region2: #{csp_diffusion_forward.5} parent=1 // pred_check
      _
    $region3: #{csp_diffusion_forward.5} parent=1 // pred_check_branch
      %11 = sbr.rel (0) target = $region5
    $region4: #{csp_diffusion_forward.5} parent=1 // pred_region
      _
    $region5: #{csp_diffusion_forward.5} parent=1 // pred_fallthru
      _
    // Predicated region
    $region6: #{csp_diffusion_forward.5} parent=1 // pred_check
      _
    $region7: #{csp_diffusion_forward.5} parent=1 // pred_check_branch
      %13 = sbr.rel (0) target = $region9
    $region8: #{csp_diffusion_forward.5} parent=1 // pred_region
      _
    $region9: #{csp_diffusion_forward.5} parent=1 // pred_fallthru
      _
    // Predicated region
    $region10: #{csp_diffusion_forward.5} parent=1 // pred_check
      _
    $region11: #{csp_diffusion_forward.5} parent=1 // pred_check_branch
      %15 = sbr.rel (0) target = $region13
    $region12: #{csp_diffusion_forward.5} parent=1 // pred_region
      _
    $region13: #{csp_diffusion_forward.5} parent=1 // pred_fallthru
      _
    // Predicated region
    $region14: #{csp_diffusion_forward.5} parent=1 // pred_check
      _
    $region15: #{csp_diffusion_forward.5} parent=1 // pred_check_branch
      %17 = sbr.rel (0) target = $region17
    $region16: #{csp_diffusion_forward.5} parent=1 // pred_region
      _
    $region17: #{csp_diffusion_forward.5} parent=1 // pred_fallthru
      _
    %v18 = vld [vmem:[%s0] sm:$0xff]
    %v19 = vld [vmem:[%s1] sm:$0xff]
    %v20 = vld [vmem:[%s2] sm:$0xff]
    %v21 = vld [vmem:[%s3] sm:$0xff]
    %v22 = vmul.f32 %v19, 2.0
    %v23 = vmul.f32 %v18, %v18
    %v24 = vsub.f32 0.0, %v23
    %v25 = vmul.f32 %v24, %v19
    %v26 = vmul.f32 %v25, 1.442695
    %v27 = vpow.pop %v26
    %v28 = vsub.f32 0.0, %v22
    %v29 = vmul.f32 %v28, 1.442695
    %v30 = vpow.pop %v29
    %v31 = vmul.f32 %v18, 2.0
    %v32 = vadd.f32 %v31, 1.0
    %v33 = vsub.f32 0.0, %v32
    %v34 = vmul.f32 %v33, %v19
    %v35 = vmul.f32 %v34, 1.442695
    %v36 = vpow.pop %v35
    %v37 = vsub.f32 %v31, 1.0
    %v38 = vmul.f32 %v37, %v19
    %v39 = vmul.f32 %v38, 1.442695
    %v40 = vpow.pop %v39
    %v41 = vmul.f32 %v18, %v27
    %v42 = vmul.f32 %v27, %v36
    %v43 = vmul.f32 %v27, %v40
    %v44 = vadd.f32 %v18, 1.0
    %v45 = vmul.f32 %v44, %v42
    %v46 = vadd.f32 %v41, %v45
    %v47 = vsub.f32 %v18, 1.0
    %v48 = vmul.f32 %v47, %v43
    %v49 = vadd.f32 %v46, %v48
    %v50 = vadd.f32 %v27, %v42
    %v51 = vadd.f32 %v50, %v43
    %v52 = vmul.f32 %v36, %v30
    %v53 = vmul.f32 %v40, %v30
    %v54 = vmul.f32 %v42, %v52
    %v55 = vmul.f32 %v43, %v53
    %v56 = vadd.f32 %v18, 2.0
    %v57 = vmul.f32 %v56, %v54
    %v58 = vadd.f32 %v49, %v57
    %v59 = vsub.f32 %v18, 2.0
    %v60 = vmul.f32 %v59, %v55
    %v61 = vadd.f32 %v58, %v60
    %v62 = vadd.f32 %v51, %v54
    %v63 = vadd.f32 %v62, %v55
    %v64 = vmul.f32 %v52, %v30
    %v65 = vmul.f32 %v53, %v30
    %v66 = vmul.f32 %v54, %v64
    %v67 = vmul.f32 %v55, %v65
    %v68 = vadd.f32 %v18, 3.0
    %v69 = vmul.f32 %v68, %v66
    %v70 = vadd.f32 %v61, %v69
    %v71 = vsub.f32 %v18, 3.0
    %v72 = vmul.f32 %v71, %v67
    %v73 = vadd.f32 %v70, %v72
    %v74 = vadd.f32 %v63, %v66
    %v75 = vadd.f32 %v74, %v67
    %v76 = vmul.f32 %v64, %v30
    %v77 = vmul.f32 %v65, %v30
    %v78 = vmul.f32 %v66, %v76
    %v79 = vmul.f32 %v67, %v77
    %v80 = vadd.f32 %v18, 4.0
    %v81 = vmul.f32 %v80, %v78
    %v82 = vadd.f32 %v73, %v81
    %v83 = vsub.f32 %v18, 4.0
    %v84 = vmul.f32 %v83, %v79
    %v85 = vadd.f32 %v82, %v84
    %v86 = vadd.f32 %v75, %v78
    %v87 = vadd.f32 %v86, %v79
    %v88 = vmul.f32 %v76, %v30
    %v89 = vmul.f32 %v77, %v30
    %v90 = vmul.f32 %v78, %v88
    %v91 = vmul.f32 %v79, %v89
    %v92 = vadd.f32 %v18, 5.0
    %v93 = vmul.f32 %v92, %v90
    %v94 = vadd.f32 %v85, %v93
    %v95 = vsub.f32 %v18, 5.0
    %v96 = vmul.f32 %v95, %v91
    %v97 = vadd.f32 %v94, %v96
    %v98 = vadd.f32 %v87, %v90
    %v99 = vadd.f32 %v98, %v91
    %v100 = vmul.f32 %v88, %v30
    %v101 = vmul.f32 %v89, %v30
    %v102 = vmul.f32 %v90, %v100
    %v103 = vmul.f32 %v91, %v101
    %v104 = vadd.f32 %v18, 6.0
    %v105 = vmul.f32 %v104, %v102
    %v106 = vadd.f32 %v97, %v105
    %v107 = vsub.f32 %v18, 6.0
    %v108 = vmul.f32 %v107, %v103
    %v109 = vadd.f32 %v106, %v108
    %v110 = vadd.f32 %v99, %v102
    %v111 = vadd.f32 %v110, %v103
    %v112 = vmul.f32 %v100, %v30
    %v113 = vmul.f32 %v101, %v30
    %v114 = vmul.f32 %v102, %v112
    %v115 = vmul.f32 %v103, %v113
    %v116 = vadd.f32 %v18, 7.0
    %v117 = vmul.f32 %v116, %v114
    %v118 = vadd.f32 %v109, %v117
    %v119 = vsub.f32 %v18, 7.0
    %v120 = vmul.f32 %v119, %v115
    %v121 = vadd.f32 %v118, %v120
    %v122 = vadd.f32 %v111, %v114
    %v123 = vadd.f32 %v122, %v115
    %v124 = vmul.f32 %v112, %v30
    %v125 = vmul.f32 %v113, %v30
    %v126 = vmul.f32 %v114, %v124
    %v127 = vmul.f32 %v115, %v125
    %v128 = vadd.f32 %v18, 8.0
    %v129 = vmul.f32 %v128, %v126
    %v130 = vadd.f32 %v121, %v129
    %v131 = vsub.f32 %v18, 8.0
    %v132 = vmul.f32 %v131, %v127
    %v133 = vadd.f32 %v130, %v132
    %v134 = vadd.f32 %v123, %v126
    %v135 = vadd.f32 %v134, %v127
    %v136 = vmul.f32 %v124, %v30
    %v137 = vmul.f32 %v125, %v30
    %v138 = vmul.f32 %v126, %v136
    %v139 = vmul.f32 %v127, %v137
    %v140 = vadd.f32 %v18, 9.0
    %v141 = vmul.f32 %v140, %v138
    %v142 = vadd.f32 %v133, %v141
    %v143 = vsub.f32 %v18, 9.0
    %v144 = vmul.f32 %v143, %v139
    %v145 = vadd.f32 %v142, %v144
    %v146 = vadd.f32 %v135, %v138
    %v147 = vadd.f32 %v146, %v139
    %v148 = vmul.f32 %v136, %v30
    %v149 = vmul.f32 %v137, %v30
    %v150 = vmul.f32 %v138, %v148
    %v151 = vmul.f32 %v139, %v149
    %v152 = vadd.f32 %v18, 10.0
    %v153 = vmul.f32 %v152, %v150
    %v154 = vadd.f32 %v145, %v153
    %v155 = vsub.f32 %v18, 10.0
    %v156 = vmul.f32 %v155, %v151
    %v157 = vadd.f32 %v154, %v156
    %v158 = vadd.f32 %v147, %v150
    %v159 = vadd.f32 %v158, %v151
    %v160 = vmul.f32 %v157, %v22
    %v161 = vadd.f32 %v159, 1e-30
    %v162 = vrcp.pop %v161
    %v163 = vmul.f32 %v160, %v162
    %v164 = vmul.f32 %v163, %v20
    %v165 = vsub.f32 %v21, %v164
    %v166 = vmul.f32 %v165, %v165
    %167 = vadd.xlane.f32.xlu0 %v166
    %v168 = vpop.xlane.xlu0 %167
    %v169 = vrot.slane %v168, 4
    %v170 = vadd.f32 %v168, %v169
    %v171 = vrot.slane %v170, 2
    %v172 = vadd.f32 %v170, %v171
    %v173 = vrot.slane %v172, 1
    %v174 = vadd.f32 %v172, %v173
    %s175 = vtos %v174
    %v176 = vstv %s175
    %v177 = vmul.f32 %v176, 0.041666668
    %vm178 = vcmask 0
    %179 = vst.msk [vmem:[#allocation2] sm:$0x1] %vm178, %v177
    // Predicated region
    $region18: #{csp_diffusion_forward.5} parent=1 // pred_check
      _
    $region19: #{csp_diffusion_forward.5} parent=1 // pred_check_branch
      %181 = sbr.rel (0) target = $region21
    $region20: #{csp_diffusion_forward.5} parent=1 // pred_region
      %s183 = ssub.s32 16, 16
      %184 = vsyncadd [#allocation3], %s183
      %s186 = sshll.u32 [#allocation2], 4
      %s187 = int_to_ptr.vmem [resolvable:$true] %s186
      %189 = dma.vmem_to_hbm [thread:$0]  %s187, 16, %s4, [#allocation3]
    $region21: #{csp_diffusion_forward.5} parent=1 // pred_fallthru
      _
    // Predicated region
    $region22: #{csp_diffusion_forward.5} parent=1 // pred_check
      _
    $region23: #{csp_diffusion_forward.5} parent=1 // pred_check_branch
      %191 = sbr.rel (0) target = $region25
    $region24: #{csp_diffusion_forward.5} parent=1 // pred_region
      %192 = dma.done [#allocation3], 16
    $region25: #{csp_diffusion_forward.5} parent=1 // pred_fallthru
      _
    %193 = vsyncpa [#allocation3], 1

</llo_original>
